<compile_context>
chip_gen: v5e
topology: v5e:2x2
jax: 0.10.0
libtpu: 0.0.40
codegen_flags: <defaults>
</compile_context>

<pallas_src>
import functools

import jax
import jax.numpy as jnp
from jax import lax
from jax.experimental import pallas as pl
from jax.experimental.pallas import tpu as pltpu

_LANE = 128


def _round_up(x, m):
    return ((x + m - 1) // m) * m


def _pad2(a, rows, cols):
    r, c = a.shape
    return jnp.pad(a, ((0, rows - r), (0, cols - c)))


# ----------------------------------------------------------------------------
# Fused kernel: one modality (grid index selects modality 0 or 1).
# ----------------------------------------------------------------------------
def _make_net_kernel(input_norm: bool, emb_norm: bool, n_valid: int):
    def kernel(x_ref, wL1_ref, bL1_ref, wR2_ref, bR2_ref,
               wDec_ref, bDec_ref, wS4_ref, bS4_ref, wC4_ref, bC4_ref,
               logq_ref, outs_ref, outc_ref):
        f32 = jnp.float32
        x = x_ref[...]
        if input_norm:
            ss = jnp.sum(x * x, axis=1, keepdims=True)
            x = x * lax.rsqrt(jnp.maximum(ss, 1e-16))   # == x / max(||x||, 1e-8)

        # encoder: Linear+Tanh, Linear+Tanh
        h1 = jnp.tanh(jnp.dot(x, wL1_ref[...], preferred_element_type=f32)
                      + bL1_ref[...])
        emb = jnp.tanh(jnp.dot(h1, wR2_ref[...], preferred_element_type=f32)
                       + bR2_ref[...])

        # dropout (eval mode) -> identity
        d = emb

        # fused tied-weight decoders: wDec = [R2_self ; R2_other] stacked on
        # rows, each (HP, RP).  Contracting axis 1 of both operands computes
        # d @ R2.T on the MXU without materializing any transpose.
        sc = jnp.tanh(
            lax.dot_general(d, wDec_ref[...], (((1,), (1,)), ((), ())),
                            preferred_element_type=f32) + bDec_ref[...])
        hp = wS4_ref.shape[0]
        s = sc[:, :hp]          # tile-aligned slices (hp is a multiple of 128)
        c = sc[:, hp:]
        outs_ref[...] = jnp.tanh(
            jnp.dot(s, wS4_ref[...], preferred_element_type=f32) + bS4_ref[...])
        outc_ref[...] = jnp.tanh(
            jnp.dot(c, wC4_ref[...], preferred_element_type=f32) + bC4_ref[...])

        # compcosdis + computeprob + log on the embedding
        e = emb
        if emb_norm:
            ss = jnp.sum(e * e, axis=1, keepdims=True)
            e = e * lax.rsqrt(jnp.maximum(ss, 1e-16))
        w12 = lax.dot_general(e, e, (((1,), (1,)), ((), ())),
                              preferred_element_type=f32)
        if emb_norm:
            # rows are unit-norm -> ||ei||*||ej|| == 1: skip the outer product.
            dis = 1.0 - w12
        else:
            rn = jnp.sqrt(jnp.sum(e * e, axis=1, keepdims=True))
            dis = 1.0 - w12 / jnp.maximum(rn * rn.T, 1e-8)

        # softmax(-dis^2) with diag removal + renorm, algebraically fused:
        # logits in [-4, 0] -> exp is safe without max subtraction; zeroing the
        # diagonal of exp(logits) and dividing once equals the reference chain.
        ex = jnp.exp(-(dis * dis))
        npad = ex.shape[0]
        rid = lax.broadcasted_iota(jnp.int32, (npad, npad), 0)
        cid = lax.broadcasted_iota(jnp.int32, (npad, npad), 1)
        keep = (cid < n_valid) & (rid != cid)    # drop padded columns + diagonal
        ex = jnp.where(keep, ex, 0.0)
        # exact reciprocal (approx=True would also fit a looser tolerance)
        inv = pl.reciprocal(jnp.sum(ex, axis=1, keepdims=True), approx=False)
        probs = ex * inv
        logq_ref[...] = jnp.log(jnp.maximum(probs, 1e-8))

    return kernel


# ----------------------------------------------------------------------------
# Full Net.forward
# ----------------------------------------------------------------------------
def net_forward(params, x1, x2, *, input_norm: bool, emb_norm: bool):
    p = params
    n = x1.shape[0]
    m1, m2 = x1.shape[1], x2.shape[1]
    hdn1, rep = p["m1R2_w"].shape
    hdn2 = p["m2R2_w"].shape[0]

    npad = _round_up(n, _LANE)                  # lane-dense (n, n) logq output
    mp = _round_up(max(m1, m2), _LANE)
    hp = _round_up(max(hdn1, hdn2), _LANE)
    rp = _round_up(rep, _LANE)

    # Zero-pad + stack both modalities so one size-2 "parallel" grid covers them.
    x_all = jnp.stack([_pad2(x1, npad, mp), _pad2(x2, npad, mp)])
    wL1 = jnp.stack([_pad2(p["m1L1_w"], mp, hp), _pad2(p["m2L1_w"], mp, hp)])
    bL1 = jnp.stack([_pad2(p["m1L1_b"], 1, hp), _pad2(p["m2L1_b"], 1, hp)])
    wR2 = jnp.stack([_pad2(p["m1R2_w"], hp, rp), _pad2(p["m2R2_w"], hp, rp)])
    bR2 = jnp.stack([_pad2(p["m1R2_b"], 1, rp), _pad2(p["m2R2_b"], 1, rp)])
    r2a = _pad2(p["m1R2_w"], hp, rp)
    r2b = _pad2(p["m2R2_w"], hp, rp)
    # mod1: self = m1R2, cross = m2R2 ; mod2: self = m2R2, cross = m1R2
    wDec = jnp.stack([jnp.concatenate([r2a, r2b], axis=0),
                      jnp.concatenate([r2b, r2a], axis=0)])            # (2, 2*hp, rp)
    bDec = jnp.stack([
        jnp.concatenate([_pad2(p["m1S3_bias"], 1, hp),
                         _pad2(p["m1C3_bias"], 1, hp)], axis=1),
        jnp.concatenate([_pad2(p["m2S3_bias"], 1, hp),
                         _pad2(p["m2C3_bias"], 1, hp)], axis=1)])      # (2, 1, 2*hp)
    wS4 = jnp.stack([_pad2(p["m1S4_w"], hp, mp), _pad2(p["m2S4_w"], hp, mp)])
    bS4 = jnp.stack([_pad2(p["m1S4_b"], 1, mp), _pad2(p["m2S4_b"], 1, mp)])
    wC4 = jnp.stack([_pad2(p["m1C4_w"], hp, mp), _pad2(p["m2C4_w"], hp, mp)])
    bC4 = jnp.stack([_pad2(p["m1C4_b"], 1, mp), _pad2(p["m2C4_b"], 1, mp)])

    def mspec(*tail):
        zeros = (0,) * len(tail)
        return pl.BlockSpec((None,) + tail, lambda i: (i,) + zeros)

    logq, outs, outc = pl.pallas_call(
        _make_net_kernel(input_norm, emb_norm, n),
        grid=(2,),
        in_specs=[mspec(npad, mp),                       # x
                  mspec(mp, hp), mspec(1, hp),           # L1
                  mspec(hp, rp), mspec(1, rp),           # R2
                  mspec(2 * hp, rp), mspec(1, 2 * hp),   # tied decoders (fused)
                  mspec(hp, mp), mspec(1, mp),           # S4
                  mspec(hp, mp), mspec(1, mp)],          # C4
        out_specs=(mspec(npad, npad), mspec(npad, mp), mspec(npad, mp)),
        out_shape=(jax.ShapeDtypeStruct((2, npad, npad), jnp.float32),
                   jax.ShapeDtypeStruct((2, npad, mp), jnp.float32),
                   jax.ShapeDtypeStruct((2, npad, mp), jnp.float32)),
        compiler_params=pltpu.CompilerParams(dimension_semantics=("parallel",)),
    )(x_all, wL1, bL1, wR2, bR2, wDec, bDec, wS4, bS4, wC4, bC4)

    q1 = logq[0, :n, :n]
    q2 = logq[1, :n, :n]
    m1outs = outs[0, :n, :m1]
    m1outc = outc[0, :n, :m2]
    m2outs = outs[1, :n, :m2]
    m2outc = outc[1, :n, :m1]
    return q1, q2, m1outs, m1outc, m2outs, m2outc


# ----------------------------------------------------------------------------
# Pure-JAX reference (mirrors the PyTorch code) for a sanity check.
# ----------------------------------------------------------------------------
def _ref_norm(x, eps=1e-8):
    return x / jnp.maximum(jnp.linalg.norm(x, axis=1, keepdims=True), eps)


def _ref_forward(p, x1, x2, input_norm, emb_norm):
    if input_norm:
        x1, x2 = _ref_norm(x1), _ref_norm(x2)
    m1EMB = jnp.tanh(jnp.tanh(x1 @ p["m1L1_w"] + p["m1L1_b"]) @ p["m1R2_w"] + p["m1R2_b"])
    m2EMB = jnp.tanh(jnp.tanh(x2 @ p["m2L1_w"] + p["m2L1_b"]) @ p["m2R2_w"] + p["m2R2_b"])
    m1OUTs = jnp.tanh(jnp.tanh(m1EMB @ p["m1R2_w"].T + p["m1S3_bias"]) @ p["m1S4_w"] + p["m1S4_b"])
    m1OUTc = jnp.tanh(jnp.tanh(m1EMB @ p["m2R2_w"].T + p["m1C3_bias"]) @ p["m1C4_w"] + p["m1C4_b"])
    m2OUTs = jnp.tanh(jnp.tanh(m2EMB @ p["m2R2_w"].T + p["m2S3_bias"]) @ p["m2S4_w"] + p["m2S4_b"])
    m2OUTc = jnp.tanh(jnp.tanh(m2EMB @ p["m1R2_w"].T + p["m2C3_bias"]) @ p["m2C4_w"] + p["m2C4_b"])

    def simprob(e):
        if emb_norm:
            e = _ref_norm(e)
        w12 = e @ e.T
        nrm = jnp.linalg.norm(e, axis=1, keepdims=True)
        dis = 1.0 - w12 / jnp.maximum(nrm * nrm.T, 1e-8)
        probs = jax.nn.softmax(-dis * dis, axis=1)
        probs = probs - jnp.diag(jnp.diag(probs))
        probs = probs / jnp.sum(probs, axis=1, keepdims=True)
        return jnp.log(jnp.maximum(probs, 1e-8))

    return simprob(m1EMB), simprob(m2EMB), m1OUTs, m1OUTc, m2OUTs, m2OUTc


# ----------------------------------------------------------------------------
# Deterministic parameter init (PyTorch nn.Linear-style uniform bounds).
# ----------------------------------------------------------------------------
def _init_linear(key, fan_in, fan_out):
    kw, kb = jax.random.split(key)
    bound = 1.0 / float(fan_in) ** 0.5
    w = jax.random.uniform(kw, (fan_in, fan_out), jnp.float32, -bound, bound)
    b = jax.random.uniform(kb, (1, fan_out), jnp.float32, -bound, bound)
    return w, b


def init_params(key, m1_size, m2_size, hdn1, hdn2, rep):
    keys = jax.random.split(key, 8)
    p = {}
    p["m1L1_w"], p["m1L1_b"] = _init_linear(keys[0], m1_size, hdn1)
    p["m1R2_w"], p["m1R2_b"] = _init_linear(keys[1], hdn1, rep)
    p["m1S4_w"], p["m1S4_b"] = _init_linear(keys[2], hdn1, m1_size)
    p["m1C4_w"], p["m1C4_b"] = _init_linear(keys[3], hdn2, m2_size)
    p["m2L1_w"], p["m2L1_b"] = _init_linear(keys[4], m2_size, hdn2)
    p["m2R2_w"], p["m2R2_b"] = _init_linear(keys[5], hdn2, rep)
    p["m2S4_w"], p["m2S4_b"] = _init_linear(keys[6], hdn2, m2_size)
    p["m2C4_w"], p["m2C4_b"] = _init_linear(keys[7], hdn1, m1_size)
    # the standalone bias Parameters start as zeros, as in the module
    p["m1S3_bias"] = jnp.zeros((1, hdn1), jnp.float32)
    p["m1C3_bias"] = jnp.zeros((1, hdn2), jnp.float32)
    p["m2S3_bias"] = jnp.zeros((1, hdn2), jnp.float32)
    p["m2C3_bias"] = jnp.zeros((1, hdn1), jnp.float32)
    return p


if __name__ == "__main__":
    # small config consistent with the module's forward
    N, M1, M2, HDN1, HDN2, REP = 8, 32, 48, 64, 56, 16
    INPUT_NORM, EMB_NORM = True, True

    key = jax.random.PRNGKey(0)
    kp, k1, k2 = jax.random.split(key, 3)
    params = init_params(kp, M1, M2, HDN1, HDN2, REP)
    x1 = jax.random.normal(k1, (N, M1), jnp.float32)
    x2 = jax.random.normal(k2, (N, M2), jnp.float32)

    fwd = jax.jit(functools.partial(net_forward, input_norm=INPUT_NORM,
                                    emb_norm=EMB_NORM))
    outs = fwd(params, x1, x2)
    outs = jax.block_until_ready(outs)

    refs = _ref_forward(params, x1, x2, INPUT_NORM, EMB_NORM)
    for got, want in zip(outs, refs):
        assert got.shape == want.shape and got.dtype == want.dtype
        assert jnp.allclose(got, want, rtol=1e-3, atol=1e-3), "mismatch vs reference"

    print("KERNEL_OK")
</pallas_src>

<mosaic_0001>
module attributes {stable_mosaic.version = 11 : i64} {
  func.func @kernel(%arg0: i32, %arg1: memref<1x128x128xf32, #tpu.memory_space<vmem>>, %arg2: memref<1x128x128xf32, #tpu.memory_space<vmem>>, %arg3: memref<1x1x128xf32, #tpu.memory_space<vmem>>, %arg4: memref<1x128x128xf32, #tpu.memory_space<vmem>>, %arg5: memref<1x1x128xf32, #tpu.memory_space<vmem>>, %arg6: memref<1x256x128xf32, #tpu.memory_space<vmem>>, %arg7: memref<1x1x256xf32, #tpu.memory_space<vmem>>, %arg8: memref<1x128x128xf32, #tpu.memory_space<vmem>>, %arg9: memref<1x1x128xf32, #tpu.memory_space<vmem>>, %arg10: memref<1x128x128xf32, #tpu.memory_space<vmem>>, %arg11: memref<1x1x128xf32, #tpu.memory_space<vmem>>, %arg12: memref<1x128x128xf32, #tpu.memory_space<vmem>>, %arg13: memref<1x128x128xf32, #tpu.memory_space<vmem>>, %arg14: memref<1x128x128xf32, #tpu.memory_space<vmem>>) attributes {dimension_semantics = [#tpu.dimension_semantics<parallel>], iteration_bounds = array<i64: 2>, scalar_prefetch = 0 : i64, scratch_operands = 0 : i64, tpu.core_type = #tpu.core_type<tc>, window_params = [{transform_indices = @transform_0, window_bounds = array<i64: 1, 128, 128>}, {transform_indices = @transform_1, window_bounds = array<i64: 1, 128, 128>}, {transform_indices = @transform_2, window_bounds = array<i64: 1, 1, 128>}, {transform_indices = @transform_3, window_bounds = array<i64: 1, 128, 128>}, {transform_indices = @transform_4, window_bounds = array<i64: 1, 1, 128>}, {transform_indices = @transform_5, window_bounds = array<i64: 1, 256, 128>}, {transform_indices = @transform_6, window_bounds = array<i64: 1, 1, 256>}, {transform_indices = @transform_7, window_bounds = array<i64: 1, 128, 128>}, {transform_indices = @transform_8, window_bounds = array<i64: 1, 1, 128>}, {transform_indices = @transform_9, window_bounds = array<i64: 1, 128, 128>}, {transform_indices = @transform_10, window_bounds = array<i64: 1, 1, 128>}, {transform_indices = @transform_11, window_bounds = array<i64: 1, 128, 128>}, {transform_indices = @transform_12, window_bounds = array<i64: 1, 128, 128>}, {transform_indices = @transform_13, window_bounds = array<i64: 1, 128, 128>}]} {
    %c0 = arith.constant 0 : index
    %c0_0 = arith.constant 0 : index
    %c0_1 = arith.constant 0 : index
    %0 = vector.load %arg1[%c0, %c0_0, %c0_1] : memref<1x128x128xf32, #tpu.memory_space<vmem>>, vector<1x128x128xf32>
    %1 = vector.shape_cast %0 : vector<1x128x128xf32> to vector<128x128xf32>
    %2 = arith.mulf %1, %1 : vector<128x128xf32>
    %cst = arith.constant dense<0.000000e+00> : vector<128xf32>
    %3 = vector.multi_reduction <add>, %2, %cst [1] : vector<128x128xf32> to vector<128xf32>
    %4 = vector.shape_cast %3 : vector<128xf32> to vector<128x1xf32>
    %cst_2 = arith.constant 1.000000e-16 : f32
    %5 = vector.broadcast %cst_2 : f32 to vector<128x1xf32>
    %6 = arith.maximumf %4, %5 : vector<128x1xf32>
    %7 = math.rsqrt %6 : vector<128x1xf32>
    %8 = vector.broadcast %7 : vector<128x1xf32> to vector<128x128xf32>
    %9 = arith.mulf %1, %8 : vector<128x128xf32>
    %c0_3 = arith.constant 0 : index
    %c0_4 = arith.constant 0 : index
    %c0_5 = arith.constant 0 : index
    %10 = vector.load %arg2[%c0_3, %c0_4, %c0_5] : memref<1x128x128xf32, #tpu.memory_space<vmem>>, vector<1x128x128xf32>
    %11 = vector.shape_cast %10 : vector<1x128x128xf32> to vector<128x128xf32>
    %cst_6 = arith.constant dense<0.000000e+00> : vector<128x128xf32>
    %12 = tpu.matmul %9, %11, %cst_6 {dimension_numbers = #tpu.dot_dimension_numbers<[1], [0], [0], [1], [0, 0, 1, 1], [], []>} : vector<128x128xf32>, vector<128x128xf32>, vector<128x128xf32> -> vector<128x128xf32>
    %c0_7 = arith.constant 0 : index
    %c0_8 = arith.constant 0 : index
    %c0_9 = arith.constant 0 : index
    %13 = vector.load %arg3[%c0_7, %c0_8, %c0_9] : memref<1x1x128xf32, #tpu.memory_space<vmem>>, vector<1x1x128xf32>
    %14 = vector.shape_cast %13 : vector<1x1x128xf32> to vector<1x128xf32>
    %15 = vector.broadcast %14 : vector<1x128xf32> to vector<128x128xf32>
    %16 = arith.addf %12, %15 : vector<128x128xf32>
    %17 = math.tanh %16 : vector<128x128xf32>
    %c0_10 = arith.constant 0 : index
    %c0_11 = arith.constant 0 : index
    %c0_12 = arith.constant 0 : index
    %18 = vector.load %arg4[%c0_10, %c0_11, %c0_12] : memref<1x128x128xf32, #tpu.memory_space<vmem>>, vector<1x128x128xf32>
    %19 = vector.shape_cast %18 : vector<1x128x128xf32> to vector<128x128xf32>
    %cst_13 = arith.constant dense<0.000000e+00> : vector<128x128xf32>
    %20 = tpu.matmul %17, %19, %cst_13 {dimension_numbers = #tpu.dot_dimension_numbers<[1], [0], [0], [1], [0, 0, 1, 1], [], []>} : vector<128x128xf32>, vector<128x128xf32>, vector<128x128xf32> -> vector<128x128xf32>
    %c0_14 = arith.constant 0 : index
    %c0_15 = arith.constant 0 : index
    %c0_16 = arith.constant 0 : index
    %21 = vector.load %arg5[%c0_14, %c0_15, %c0_16] : memref<1x1x128xf32, #tpu.memory_space<vmem>>, vector<1x1x128xf32>
    %22 = vector.shape_cast %21 : vector<1x1x128xf32> to vector<1x128xf32>
    %23 = vector.broadcast %22 : vector<1x128xf32> to vector<128x128xf32>
    %24 = arith.addf %20, %23 : vector<128x128xf32>
    %25 = math.tanh %24 : vector<128x128xf32>
    %c0_17 = arith.constant 0 : index
    %c0_18 = arith.constant 0 : index
    %c0_19 = arith.constant 0 : index
    %26 = vector.load %arg6[%c0_17, %c0_18, %c0_19] : memref<1x256x128xf32, #tpu.memory_space<vmem>>, vector<1x256x128xf32>
    %27 = vector.shape_cast %26 : vector<1x256x128xf32> to vector<256x128xf32>
    %cst_20 = arith.constant dense<0.000000e+00> : vector<128x256xf32>
    %28 = tpu.matmul %25, %27, %cst_20 {dimension_numbers = #tpu.dot_dimension_numbers<[1], [1], [0], [0], [0, 0, 1, 0], [], []>} : vector<128x128xf32>, vector<256x128xf32>, vector<128x256xf32> -> vector<128x256xf32>
    %c0_21 = arith.constant 0 : index
    %c0_22 = arith.constant 0 : index
    %c0_23 = arith.constant 0 : index
    %29 = vector.load %arg7[%c0_21, %c0_22, %c0_23] : memref<1x1x256xf32, #tpu.memory_space<vmem>>, vector<1x1x256xf32>
    %30 = vector.shape_cast %29 : vector<1x1x256xf32> to vector<1x256xf32>
    %31 = vector.broadcast %30 : vector<1x256xf32> to vector<128x256xf32>
    %32 = arith.addf %28, %31 : vector<128x256xf32>
    %33 = math.tanh %32 : vector<128x256xf32>
    %34 = vector.extract_strided_slice %33 {offsets = [0, 0], sizes = [128, 128], strides = [1, 1]} : vector<128x256xf32> to vector<128x128xf32>
    %35 = vector.extract_strided_slice %33 {offsets = [0, 128], sizes = [128, 128], strides = [1, 1]} : vector<128x256xf32> to vector<128x128xf32>
    %c0_24 = arith.constant 0 : index
    %c0_25 = arith.constant 0 : index
    %c0_26 = arith.constant 0 : index
    %36 = vector.load %arg8[%c0_24, %c0_25, %c0_26] : memref<1x128x128xf32, #tpu.memory_space<vmem>>, vector<1x128x128xf32>
    %37 = vector.shape_cast %36 : vector<1x128x128xf32> to vector<128x128xf32>
    %cst_27 = arith.constant dense<0.000000e+00> : vector<128x128xf32>
    %38 = tpu.matmul %34, %37, %cst_27 {dimension_numbers = #tpu.dot_dimension_numbers<[1], [0], [0], [1], [0, 0, 1, 1], [], []>} : vector<128x128xf32>, vector<128x128xf32>, vector<128x128xf32> -> vector<128x128xf32>
    %c0_28 = arith.constant 0 : index
    %c0_29 = arith.constant 0 : index
    %c0_30 = arith.constant 0 : index
    %39 = vector.load %arg9[%c0_28, %c0_29, %c0_30] : memref<1x1x128xf32, #tpu.memory_space<vmem>>, vector<1x1x128xf32>
    %40 = vector.shape_cast %39 : vector<1x1x128xf32> to vector<1x128xf32>
    %41 = vector.broadcast %40 : vector<1x128xf32> to vector<128x128xf32>
    %42 = arith.addf %38, %41 : vector<128x128xf32>
    %43 = math.tanh %42 : vector<128x128xf32>
    %c0_31 = arith.constant 0 : index
    %c0_32 = arith.constant 0 : index
    %c0_33 = arith.constant 0 : index
    %44 = vector.load %arg13[%c0_31, %c0_32, %c0_33] : memref<1x128x128xf32, #tpu.memory_space<vmem>>, vector<1x128x128xf32>
    %45 = vector.shape_cast %44 : vector<1x128x128xf32> to vector<128x128xf32>
    %46 = vector.shape_cast %43 : vector<128x128xf32> to vector<1x128x128xf32>
    tpu.vector_store %arg13[%c0_31, %c0_32, %c0_33], %46 {strides = array<i32>} : memref<1x128x128xf32, #tpu.memory_space<vmem>>, vector<1x128x128xf32>,
    %c0_34 = arith.constant 0 : index
    %c0_35 = arith.constant 0 : index
    %c0_36 = arith.constant 0 : index
    %47 = vector.load %arg10[%c0_34, %c0_35, %c0_36] : memref<1x128x128xf32, #tpu.memory_space<vmem>>, vector<1x128x128xf32>
    %48 = vector.shape_cast %47 : vector<1x128x128xf32> to vector<128x128xf32>
    %cst_37 = arith.constant dense<0.000000e+00> : vector<128x128xf32>
    %49 = tpu.matmul %35, %48, %cst_37 {dimension_numbers = #tpu.dot_dimension_numbers<[1], [0], [0], [1], [0, 0, 1, 1], [], []>} : vector<128x128xf32>, vector<128x128xf32>, vector<128x128xf32> -> vector<128x128xf32>
    %c0_38 = arith.constant 0 : index
    %c0_39 = arith.constant 0 : index
    %c0_40 = arith.constant 0 : index
    %50 = vector.load %arg11[%c0_38, %c0_39, %c0_40] : memref<1x1x128xf32, #tpu.memory_space<vmem>>, vector<1x1x128xf32>
    %51 = vector.shape_cast %50 : vector<1x1x128xf32> to vector<1x128xf32>
    %52 = vector.broadcast %51 : vector<1x128xf32> to vector<128x128xf32>
    %53 = arith.addf %49, %52 : vector<128x128xf32>
    %54 = math.tanh %53 : vector<128x128xf32>
    %c0_41 = arith.constant 0 : index
    %c0_42 = arith.constant 0 : index
    %c0_43 = arith.constant 0 : index
    %55 = vector.load %arg14[%c0_41, %c0_42, %c0_43] : memref<1x128x128xf32, #tpu.memory_space<vmem>>, vector<1x128x128xf32>
    %56 = vector.shape_cast %55 : vector<1x128x128xf32> to vector<128x128xf32>
    %57 = vector.shape_cast %54 : vector<128x128xf32> to vector<1x128x128xf32>
    tpu.vector_store %arg14[%c0_41, %c0_42, %c0_43], %57 {strides = array<i32>} : memref<1x128x128xf32, #tpu.memory_space<vmem>>, vector<1x128x128xf32>,
    %58 = arith.mulf %25, %25 : vector<128x128xf32>
    %cst_44 = arith.constant dense<0.000000e+00> : vector<128xf32>
    %59 = vector.multi_reduction <add>, %58, %cst_44 [1] : vector<128x128xf32> to vector<128xf32>
    %60 = vector.shape_cast %59 : vector<128xf32> to vector<128x1xf32>
    %cst_45 = arith.constant 1.000000e-16 : f32
    %61 = vector.broadcast %cst_45 : f32 to vector<128x1xf32>
    %62 = arith.maximumf %60, %61 : vector<128x1xf32>
    %63 = math.rsqrt %62 : vector<128x1xf32>
    %64 = vector.broadcast %63 : vector<128x1xf32> to vector<128x128xf32>
    %65 = arith.mulf %25, %64 : vector<128x128xf32>
    %cst_46 = arith.constant dense<0.000000e+00> : vector<128x128xf32>
    %66 = tpu.matmul %65, %65, %cst_46 {dimension_numbers = #tpu.dot_dimension_numbers<[1], [1], [0], [0], [0, 0, 1, 0], [], []>} : vector<128x128xf32>, vector<128x128xf32>, vector<128x128xf32> -> vector<128x128xf32>
    %cst_47 = arith.constant 1.000000e+00 : f32
    %67 = vector.broadcast %cst_47 : f32 to vector<128x128xf32>
    %68 = arith.subf %67, %66 : vector<128x128xf32>
    %69 = arith.mulf %68, %68 : vector<128x128xf32>
    %cst_48 = arith.constant 0.000000e+00 : f32
    %70 = vector.broadcast %cst_48 : f32 to vector<128x128xf32>
    %71 = arith.subf %70, %69 : vector<128x128xf32>
    %72 = math.exp %71 : vector<128x128xf32>
    %73 = tpu.iota {dimensions = array<i32: 0>} : vector<128x128xi32>
    %74 = tpu.iota {dimensions = array<i32: 1>} : vector<128x128xi32>
    %c8_i32 = arith.constant 8 : i32
    %75 = vector.broadcast %c8_i32 : i32 to vector<128x128xi32>
    %76 = arith.cmpi slt, %74, %75 : vector<128x128xi32>
    %77 = arith.cmpi ne, %73, %74 : vector<128x128xi32>
    %78 = arith.andi %76, %77 : vector<128x128xi1>
    %cst_49 = arith.constant 0.000000e+00 : f32
    %79 = vector.broadcast %cst_49 : f32 to vector<128x128xf32>
    %80 = arith.select %78, %72, %79 : vector<128x128xi1>, vector<128x128xf32>
    %cst_50 = arith.constant dense<0.000000e+00> : vector<128xf32>
    %81 = vector.multi_reduction <add>, %80, %cst_50 [1] : vector<128x128xf32> to vector<128xf32>
    %82 = vector.shape_cast %81 : vector<128xf32> to vector<128x1xf32>
    %83 = tpu.reciprocal %82 : vector<128x1xf32> -> vector<128x1xf32>
    %84 = vector.broadcast %83 : vector<128x1xf32> to vector<128x128xf32>
    %85 = arith.mulf %80, %84 : vector<128x128xf32>
    %cst_51 = arith.constant 9.99999993E-9 : f32
    %86 = vector.broadcast %cst_51 : f32 to vector<128x128xf32>
    %87 = arith.maximumf %85, %86 : vector<128x128xf32>
    %88 = math.log %87 : vector<128x128xf32>
    %c0_52 = arith.constant 0 : index
    %c0_53 = arith.constant 0 : index
    %c0_54 = arith.constant 0 : index
    %89 = vector.load %arg12[%c0_52, %c0_53, %c0_54] : memref<1x128x128xf32, #tpu.memory_space<vmem>>, vector<1x128x128xf32>
    %90 = vector.shape_cast %89 : vector<1x128x128xf32> to vector<128x128xf32>
    %91 = vector.shape_cast %88 : vector<128x128xf32> to vector<1x128x128xf32>
    tpu.vector_store %arg12[%c0_52, %c0_53, %c0_54], %91 {strides = array<i32>} : memref<1x128x128xf32, #tpu.memory_space<vmem>>, vector<1x128x128xf32>,
    return
  }
  func.func @transform_0(%arg0: i32) -> (i32, i32, i32) {
    %c0_i32 = arith.constant 0 : i32
    %c0_i32_0 = arith.constant 0 : i32
    %c0_i32_1 = arith.constant 0 : i32
    return %arg0, %c0_i32, %c0_i32_0 : i32, i32, i32
  }
  func.func @transform_1(%arg0: i32) -> (i32, i32, i32) {
    %c0_i32 = arith.constant 0 : i32
    %c0_i32_0 = arith.constant 0 : i32
    %c0_i32_1 = arith.constant 0 : i32
    return %arg0, %c0_i32, %c0_i32_0 : i32, i32, i32
  }
  func.func @transform_2(%arg0: i32) -> (i32, i32, i32) {
    %c0_i32 = arith.constant 0 : i32
    %c0_i32_0 = arith.constant 0 : i32
    %c0_i32_1 = arith.constant 0 : i32
    return %arg0, %c0_i32, %c0_i32_0 : i32, i32, i32
  }
  func.func @transform_3(%arg0: i32) -> (i32, i32, i32) {
    %c0_i32 = arith.constant 0 : i32
    %c0_i32_0 = arith.constant 0 : i32
    %c0_i32_1 = arith.constant 0 : i32
    return %arg0, %c0_i32, %c0_i32_0 : i32, i32, i32
  }
  func.func @transform_4(%arg0: i32) -> (i32, i32, i32) {
    %c0_i32 = arith.constant 0 : i32
    %c0_i32_0 = arith.constant 0 : i32
    %c0_i32_1 = arith.constant 0 : i32
    return %arg0, %c0_i32, %c0_i32_0 : i32, i32, i32
  }
  func.func @transform_5(%arg0: i32) -> (i32, i32, i32) {
    %c0_i32 = arith.constant 0 : i32
    %c0_i32_0 = arith.constant 0 : i32
    %c0_i32_1 = arith.constant 0 : i32
    return %arg0, %c0_i32, %c0_i32_0 : i32, i32, i32
  }
  func.func @transform_6(%arg0: i32) -> (i32, i32, i32) {
    %c0_i32 = arith.constant 0 : i32
    %c0_i32_0 = arith.constant 0 : i32
    %c0_i32_1 = arith.constant 0 : i32
    return %arg0, %c0_i32, %c0_i32_0 : i32, i32, i32
  }
  func.func @transform_7(%arg0: i32) -> (i32, i32, i32) {
    %c0_i32 = arith.constant 0 : i32
    %c0_i32_0 = arith.constant 0 : i32
    %c0_i32_1 = arith.constant 0 : i32
    return %arg0, %c0_i32, %c0_i32_0 : i32, i32, i32
  }
  func.func @transform_8(%arg0: i32) -> (i32, i32, i32) {
    %c0_i32 = arith.constant 0 : i32
    %c0_i32_0 = arith.constant 0 : i32
    %c0_i32_1 = arith.constant 0 : i32
    return %arg0, %c0_i32, %c0_i32_0 : i32, i32, i32
  }
  func.func @transform_9(%arg0: i32) -> (i32, i32, i32) {
    %c0_i32 = arith.constant 0 : i32
    %c0_i32_0 = arith.constant 0 : i32
    %c0_i32_1 = arith.constant 0 : i32
    return %arg0, %c0_i32, %c0_i32_0 : i32, i32, i32
  }
  func.func @transform_10(%arg0: i32) -> (i32, i32, i32) {
    %c0_i32 = arith.constant 0 : i32
    %c0_i32_0 = arith.constant 0 : i32
    %c0_i32_1 = arith.constant 0 : i32
    return %arg0, %c0_i32, %c0_i32_0 : i32, i32, i32
  }
  func.func @transform_11(%arg0: i32) -> (i32, i32, i32) {
    %c0_i32 = arith.constant 0 : i32
    %c0_i32_0 = arith.constant 0 : i32
    %c0_i32_1 = arith.constant 0 : i32
    return %arg0, %c0_i32, %c0_i32_0 : i32, i32, i32
  }
  func.func @transform_12(%arg0: i32) -> (i32, i32, i32) {
    %c0_i32 = arith.constant 0 : i32
    %c0_i32_0 = arith.constant 0 : i32
    %c0_i32_1 = arith.constant 0 : i32
    return %arg0, %c0_i32, %c0_i32_0 : i32, i32, i32
  }
  func.func @transform_13(%arg0: i32) -> (i32, i32, i32) {
    %c0_i32 = arith.constant 0 : i32
    %c0_i32_0 = arith.constant 0 : i32
    %c0_i32_1 = arith.constant 0 : i32
    return %arg0, %c0_i32, %c0_i32_0 : i32, i32, i32
  }
}

</mosaic_0001>

<llo_original>
// kernel: net_forward.1
$region0: #{net_forward.1}
  #allocation0 [shape = 'u32[]', space=smem, size = 0x4, offset = 0x4, fixed_abs, tag = 'smem constant byte address 0x4 - core index']
  #allocation1 [shape = 'u32[72,128]{1,0:T(1,128)}', space=vmem, size = 0x9000, scoped, tag = 'internal scratch']
  %s0 = inlined_call_operand.vmem [shape: f32[2,128,128], index: 0, kind: input, shape index: {}]
  %s1 = inlined_call_operand.vmem [shape: f32[2,128,128], index: 1, kind: input, shape index: {}]
  %s2 = inlined_call_operand.vmem [shape: f32[2,1,128], index: 2, kind: input, shape index: {}]
  %s3 = inlined_call_operand.vmem [shape: f32[2,128,128], index: 3, kind: input, shape index: {}]
  %s4 = inlined_call_operand.vmem [shape: f32[2,1,128], index: 4, kind: input, shape index: {}]
  %s5 = inlined_call_operand.vmem [shape: f32[2,256,128], index: 5, kind: input, shape index: {}]
  %s6 = inlined_call_operand.vmem [shape: f32[2,1,256], index: 6, kind: input, shape index: {}]
  %s7 = inlined_call_operand.vmem [shape: f32[2,128,128], index: 7, kind: input, shape index: {}]
  %s8 = inlined_call_operand.vmem [shape: f32[2,1,128], index: 8, kind: input, shape index: {}]
  %s9 = inlined_call_operand.vmem [shape: f32[2,128,128], index: 9, kind: input, shape index: {}]
  %s10 = inlined_call_operand.vmem [shape: f32[2,1,128], index: 10, kind: input, shape index: {}]
  %s11 = inlined_call_operand.vmem [shape: f32[2,128,128], index: 11, kind: output, shape index: {0}]
  %s12 = inlined_call_operand.vmem [shape: f32[2,128,128], index: 12, kind: output, shape index: {1}]
  %s13 = inlined_call_operand.vmem [shape: f32[2,128,128], index: 13, kind: output, shape index: {2}]
  %14 = xla_tuple %s11, %s12, %s13
  %s15 = sld [smem:[#allocation0]]
  $region93: #{net_forward.1} parent=0
    _
  %s17 = ssub.s32 1, %s15
  %s18 = scalar_select 0, %s17, %s15
  loop: start=0, step=1, limit=4
  $region2: #{net_forward.1} parent=0 // loop_pre_header
    _
  $region3: #{net_forward.1} parent=0 // loop_header
    %s20 = sphi 0, %s24
    %p21 = scmp.ge.s32.totalorder %s20, 4
    %s30 = sphi 0, %s32
    %s33 = sphi 0, %s30
    %s34 = sphi 0, %s33
    %s50 = sphi 0, %s34
    %s56 = sphi 0, %s58
    %s59 = sphi 0, %s56
    %s60 = sphi 0, %s59
    %s76 = sphi 0, %s60
    %s82 = sphi 0, %s84
    %s85 = sphi 0, %s82
    %s86 = sphi 0, %s85
    %s102 = sphi 0, %s86
    %s108 = sphi 0, %s110
    %s111 = sphi 0, %s108
    %s112 = sphi 0, %s111
    %s128 = sphi 0, %s112
    %s134 = sphi 0, %s136
    %s137 = sphi 0, %s134
    %s138 = sphi 0, %s137
    %s154 = sphi 0, %s138
    %s160 = sphi 0, %s162
    %s163 = sphi 0, %s160
    %s164 = sphi 0, %s163
    %s180 = sphi 0, %s164
    %s186 = sphi 0, %s188
    %s189 = sphi 0, %s186
    %s190 = sphi 0, %s189
    %s206 = sphi 0, %s190
    %s212 = sphi 0, %s214
    %s215 = sphi 0, %s212
    %s216 = sphi 0, %s215
    %s232 = sphi 0, %s216
    %s238 = sphi 0, %s240
    %s241 = sphi 0, %s238
    %s242 = sphi 0, %s241
    %s258 = sphi 0, %s242
    %s264 = sphi 0, %s266
    %s267 = sphi 0, %s264
    %s268 = sphi 0, %s267
    %s284 = sphi 0, %s268
    %s290 = sphi 0, %s292
    %s293 = sphi 0, %s290
    %s294 = sphi 0, %s293
    %s310 = sphi 0, %s294
    %s316 = sphi 0, %s318
    %s319 = sphi 0, %s316
    %s320 = sphi 0, %s319
    %s336 = sphi 0, %s320
    %s342 = sphi 0, %s344
    %s345 = sphi 0, %s342
    %s346 = sphi 0, %s345
    %s362 = sphi 0, %s346
    %s368 = sphi 0, %s370
    %s371 = sphi 0, %s368
    %s372 = sphi 0, %s371
    %s388 = sphi 0, %s372
  $region4: #{net_forward.1} parent=0 // loop_header_branch
    %23 = sbr.rel (%p21) target = $region8
  $region5: #{net_forward.1} parent=0 // loop_body
    %s25 = ssub.s32 %s20, 1
    %s26 = ssub.s32 %s20, 2
    %s27 = sadd.s32 %s20, 1
    %s28 = ssub.s32 %s20, %s27
    %p29 = scmp.eq.s32.totalorder %s28, 0
    %s31 = sadd.s32 %s30, 1
    %s32 = scalar_select %p29, %s30, %s31
    %p35 = pneg %p29
    %p36 = scmp.eq.s32.totalorder %s20, 1
    %p37 = por %p35, %p36
    %p38 = scmp.ne.s32.totalorder %s30, %s33
    %p39 = scmp.eq.s32.totalorder %s20, 0
    %p40 = por %p38, %p39
    %p41 = scmp.ne.s32.totalorder %s30, %s33
    %p42 = scmp.eq.s32.totalorder %s25, 1
    %p43 = por %p41, %p42
    %p44 = scmp.ne.s32.totalorder %s33, %s34
    %p45 = scmp.eq.s32.totalorder %s25, 0
    %p46 = por %p44, %p45
    %p47 = scmp.ne.s32.totalorder %s33, %s34
    %p48 = scmp.eq.s32.totalorder %s26, 1
    %p49 = por %p47, %p48
    %p51 = scmp.ne.s32.totalorder %s34, %s50
    %p52 = scmp.eq.s32.totalorder %s26, 0
    %p53 = por %p51, %p52
    %s54 = ssub.s32 %s20, %s27
    %p55 = scmp.eq.s32.totalorder %s54, 0
    %s57 = sadd.s32 %s56, 1
    %s58 = scalar_select %p55, %s56, %s57
    %p61 = pneg %p55
    %p62 = scmp.eq.s32.totalorder %s20, 1
    %p63 = por %p61, %p62
    %p64 = scmp.ne.s32.totalorder %s56, %s59
    %p65 = scmp.eq.s32.totalorder %s20, 0
    %p66 = por %p64, %p65
    %p67 = scmp.ne.s32.totalorder %s56, %s59
    %p68 = scmp.eq.s32.totalorder %s25, 1
    %p69 = por %p67, %p68
    %p70 = scmp.ne.s32.totalorder %s59, %s60
    %p71 = scmp.eq.s32.totalorder %s25, 0
    %p72 = por %p70, %p71
    %p73 = scmp.ne.s32.totalorder %s59, %s60
    %p74 = scmp.eq.s32.totalorder %s26, 1
    %p75 = por %p73, %p74
    %p77 = scmp.ne.s32.totalorder %s60, %s76
    %p78 = scmp.eq.s32.totalorder %s26, 0
    %p79 = por %p77, %p78
    %s80 = ssub.s32 %s20, %s27
    %p81 = scmp.eq.s32.totalorder %s80, 0
    %s83 = sadd.s32 %s82, 1
    %s84 = scalar_select %p81, %s82, %s83
    %p87 = pneg %p81
    %p88 = scmp.eq.s32.totalorder %s20, 1
    %p89 = por %p87, %p88
    %p90 = scmp.ne.s32.totalorder %s82, %s85
    %p91 = scmp.eq.s32.totalorder %s20, 0
    %p92 = por %p90, %p91
    %p93 = scmp.ne.s32.totalorder %s82, %s85
    %p94 = scmp.eq.s32.totalorder %s25, 1
    %p95 = por %p93, %p94
    %p96 = scmp.ne.s32.totalorder %s85, %s86
    %p97 = scmp.eq.s32.totalorder %s25, 0
    %p98 = por %p96, %p97
    %p99 = scmp.ne.s32.totalorder %s85, %s86
    %p100 = scmp.eq.s32.totalorder %s26, 1
    %p101 = por %p99, %p100
    %p103 = scmp.ne.s32.totalorder %s86, %s102
    %p104 = scmp.eq.s32.totalorder %s26, 0
    %p105 = por %p103, %p104
    %s106 = ssub.s32 %s20, %s27
    %p107 = scmp.eq.s32.totalorder %s106, 0
    %s109 = sadd.s32 %s108, 1
    %s110 = scalar_select %p107, %s108, %s109
    %p113 = pneg %p107
    %p114 = scmp.eq.s32.totalorder %s20, 1
    %p115 = por %p113, %p114
    %p116 = scmp.ne.s32.totalorder %s108, %s111
    %p117 = scmp.eq.s32.totalorder %s20, 0
    %p118 = por %p116, %p117
    %p119 = scmp.ne.s32.totalorder %s108, %s111
    %p120 = scmp.eq.s32.totalorder %s25, 1
    %p121 = por %p119, %p120
    %p122 = scmp.ne.s32.totalorder %s111, %s112
    %p123 = scmp.eq.s32.totalorder %s25, 0
    %p124 = por %p122, %p123
    %p125 = scmp.ne.s32.totalorder %s111, %s112
    %p126 = scmp.eq.s32.totalorder %s26, 1
    %p127 = por %p125, %p126
    %p129 = scmp.ne.s32.totalorder %s112, %s128
    %p130 = scmp.eq.s32.totalorder %s26, 0
    %p131 = por %p129, %p130
    %s132 = ssub.s32 %s20, %s27
    %p133 = scmp.eq.s32.totalorder %s132, 0
    %s135 = sadd.s32 %s134, 1
    %s136 = scalar_select %p133, %s134, %s135
    %p139 = pneg %p133
    %p140 = scmp.eq.s32.totalorder %s20, 1
    %p141 = por %p139, %p140
    %p142 = scmp.ne.s32.totalorder %s134, %s137
    %p143 = scmp.eq.s32.totalorder %s20, 0
    %p144 = por %p142, %p143
    %p145 = scmp.ne.s32.totalorder %s134, %s137
    %p146 = scmp.eq.s32.totalorder %s25, 1
    %p147 = por %p145, %p146
    %p148 = scmp.ne.s32.totalorder %s137, %s138
    %p149 = scmp.eq.s32.totalorder %s25, 0
    %p150 = por %p148, %p149
    %p151 = scmp.ne.s32.totalorder %s137, %s138
    %p152 = scmp.eq.s32.totalorder %s26, 1
    %p153 = por %p151, %p152
    %p155 = scmp.ne.s32.totalorder %s138, %s154
    %p156 = scmp.eq.s32.totalorder %s26, 0
    %p157 = por %p155, %p156
    %s158 = ssub.s32 %s20, %s27
    %p159 = scmp.eq.s32.totalorder %s158, 0
    %s161 = sadd.s32 %s160, 1
    %s162 = scalar_select %p159, %s160, %s161
    %p165 = pneg %p159
    %p166 = scmp.eq.s32.totalorder %s20, 1
    %p167 = por %p165, %p166
    %p168 = scmp.ne.s32.totalorder %s160, %s163
    %p169 = scmp.eq.s32.totalorder %s20, 0
    %p170 = por %p168, %p169
    %p171 = scmp.ne.s32.totalorder %s160, %s163
    %p172 = scmp.eq.s32.totalorder %s25, 1
    %p173 = por %p171, %p172
    %p174 = scmp.ne.s32.totalorder %s163, %s164
    %p175 = scmp.eq.s32.totalorder %s25, 0
    %p176 = por %p174, %p175
    %p177 = scmp.ne.s32.totalorder %s163, %s164
    %p178 = scmp.eq.s32.totalorder %s26, 1
    %p179 = por %p177, %p178
    %p181 = scmp.ne.s32.totalorder %s164, %s180
    %p182 = scmp.eq.s32.totalorder %s26, 0
    %p183 = por %p181, %p182
    %s184 = ssub.s32 %s20, %s27
    %p185 = scmp.eq.s32.totalorder %s184, 0
    %s187 = sadd.s32 %s186, 1
    %s188 = scalar_select %p185, %s186, %s187
    %p191 = pneg %p185
    %p192 = scmp.eq.s32.totalorder %s20, 1
    %p193 = por %p191, %p192
    %p194 = scmp.ne.s32.totalorder %s186, %s189
    %p195 = scmp.eq.s32.totalorder %s20, 0
    %p196 = por %p194, %p195
    %p197 = scmp.ne.s32.totalorder %s186, %s189
    %p198 = scmp.eq.s32.totalorder %s25, 1
    %p199 = por %p197, %p198
    %p200 = scmp.ne.s32.totalorder %s189, %s190
    %p201 = scmp.eq.s32.totalorder %s25, 0
    %p202 = por %p200, %p201
    %p203 = scmp.ne.s32.totalorder %s189, %s190
    %p204 = scmp.eq.s32.totalorder %s26, 1
    %p205 = por %p203, %p204
    %p207 = scmp.ne.s32.totalorder %s190, %s206
    %p208 = scmp.eq.s32.totalorder %s26, 0
    %p209 = por %p207, %p208
    %s210 = ssub.s32 %s20, %s27
    %p211 = scmp.eq.s32.totalorder %s210, 0
    %s213 = sadd.s32 %s212, 1
    %s214 = scalar_select %p211, %s212, %s213
    %p217 = pneg %p211
    %p218 = scmp.eq.s32.totalorder %s20, 1
    %p219 = por %p217, %p218
    %p220 = scmp.ne.s32.totalorder %s212, %s215
    %p221 = scmp.eq.s32.totalorder %s20, 0
    %p222 = por %p220, %p221
    %p223 = scmp.ne.s32.totalorder %s212, %s215
    %p224 = scmp.eq.s32.totalorder %s25, 1
    %p225 = por %p223, %p224
    %p226 = scmp.ne.s32.totalorder %s215, %s216
    %p227 = scmp.eq.s32.totalorder %s25, 0
    %p228 = por %p226, %p227
    %p229 = scmp.ne.s32.totalorder %s215, %s216
    %p230 = scmp.eq.s32.totalorder %s26, 1
    %p231 = por %p229, %p230
    %p233 = scmp.ne.s32.totalorder %s216, %s232
    %p234 = scmp.eq.s32.totalorder %s26, 0
    %p235 = por %p233, %p234
    %s236 = ssub.s32 %s20, %s27
    %p237 = scmp.eq.s32.totalorder %s236, 0
    %s239 = sadd.s32 %s238, 1
    %s240 = scalar_select %p237, %s238, %s239
    %p243 = pneg %p237
    %p244 = scmp.eq.s32.totalorder %s20, 1
    %p245 = por %p243, %p244
    %p246 = scmp.ne.s32.totalorder %s238, %s241
    %p247 = scmp.eq.s32.totalorder %s20, 0
    %p248 = por %p246, %p247
    %p249 = scmp.ne.s32.totalorder %s238, %s241
    %p250 = scmp.eq.s32.totalorder %s25, 1
    %p251 = por %p249, %p250
    %p252 = scmp.ne.s32.totalorder %s241, %s242
    %p253 = scmp.eq.s32.totalorder %s25, 0
    %p254 = por %p252, %p253
    %p255 = scmp.ne.s32.totalorder %s241, %s242
    %p256 = scmp.eq.s32.totalorder %s26, 1
    %p257 = por %p255, %p256
    %p259 = scmp.ne.s32.totalorder %s242, %s258
    %p260 = scmp.eq.s32.totalorder %s26, 0
    %p261 = por %p259, %p260
    %s262 = ssub.s32 %s20, %s27
    %p263 = scmp.eq.s32.totalorder %s262, 0
    %s265 = sadd.s32 %s264, 1
    %s266 = scalar_select %p263, %s264, %s265
    %p269 = pneg %p263
    %p270 = scmp.eq.s32.totalorder %s20, 1
    %p271 = por %p269, %p270
    %p272 = scmp.ne.s32.totalorder %s264, %s267
    %p273 = scmp.eq.s32.totalorder %s20, 0
    %p274 = por %p272, %p273
    %p275 = scmp.ne.s32.totalorder %s264, %s267
    %p276 = scmp.eq.s32.totalorder %s25, 1
    %p277 = por %p275, %p276
    %p278 = scmp.ne.s32.totalorder %s267, %s268
    %p279 = scmp.eq.s32.totalorder %s25, 0
    %p280 = por %p278, %p279
    %p281 = scmp.ne.s32.totalorder %s267, %s268
    %p282 = scmp.eq.s32.totalorder %s26, 1
    %p283 = por %p281, %p282
    %p285 = scmp.ne.s32.totalorder %s268, %s284
    %p286 = scmp.eq.s32.totalorder %s26, 0
    %p287 = por %p285, %p286
    %s288 = ssub.s32 %s20, %s27
    %p289 = scmp.eq.s32.totalorder %s288, 0
    %s291 = sadd.s32 %s290, 1
    %s292 = scalar_select %p289, %s290, %s291
    %p295 = pneg %p289
    %p296 = scmp.eq.s32.totalorder %s20, 1
    %p297 = por %p295, %p296
    %p298 = scmp.ne.s32.totalorder %s290, %s293
    %p299 = scmp.eq.s32.totalorder %s20, 0
    %p300 = por %p298, %p299
    %p301 = scmp.ne.s32.totalorder %s290, %s293
    %p302 = scmp.eq.s32.totalorder %s25, 1
    %p303 = por %p301, %p302
    %p304 = scmp.ne.s32.totalorder %s293, %s294
    %p305 = scmp.eq.s32.totalorder %s25, 0
    %p306 = por %p304, %p305
    %p307 = scmp.ne.s32.totalorder %s293, %s294
    %p308 = scmp.eq.s32.totalorder %s26, 1
    %p309 = por %p307, %p308
    %p311 = scmp.ne.s32.totalorder %s294, %s310
    %p312 = scmp.eq.s32.totalorder %s26, 0
    %p313 = por %p311, %p312
    %s314 = ssub.s32 %s20, %s27
    %p315 = scmp.eq.s32.totalorder %s314, 0
    %s317 = sadd.s32 %s316, 1
    %s318 = scalar_select %p315, %s316, %s317
    %p321 = pneg %p315
    %p322 = scmp.eq.s32.totalorder %s20, 1
    %p323 = por %p321, %p322
    %p324 = scmp.ne.s32.totalorder %s316, %s319
    %p325 = scmp.eq.s32.totalorder %s20, 0
    %p326 = por %p324, %p325
    %p327 = scmp.ne.s32.totalorder %s316, %s319
    %p328 = scmp.eq.s32.totalorder %s25, 1
    %p329 = por %p327, %p328
    %p330 = scmp.ne.s32.totalorder %s319, %s320
    %p331 = scmp.eq.s32.totalorder %s25, 0
    %p332 = por %p330, %p331
    %p333 = scmp.ne.s32.totalorder %s319, %s320
    %p334 = scmp.eq.s32.totalorder %s26, 1
    %p335 = por %p333, %p334
    %p337 = scmp.ne.s32.totalorder %s320, %s336
    %p338 = scmp.eq.s32.totalorder %s26, 0
    %p339 = por %p337, %p338
    %s340 = ssub.s32 %s20, %s27
    %p341 = scmp.eq.s32.totalorder %s340, 0
    %s343 = sadd.s32 %s342, 1
    %s344 = scalar_select %p341, %s342, %s343
    %p347 = pneg %p341
    %p348 = scmp.eq.s32.totalorder %s20, 1
    %p349 = por %p347, %p348
    %p350 = scmp.ne.s32.totalorder %s342, %s345
    %p351 = scmp.eq.s32.totalorder %s20, 0
    %p352 = por %p350, %p351
    %p353 = scmp.ne.s32.totalorder %s342, %s345
    %p354 = scmp.eq.s32.totalorder %s25, 1
    %p355 = por %p353, %p354
    %p356 = scmp.ne.s32.totalorder %s345, %s346
    %p357 = scmp.eq.s32.totalorder %s25, 0
    %p358 = por %p356, %p357
    %p359 = scmp.ne.s32.totalorder %s345, %s346
    %p360 = scmp.eq.s32.totalorder %s26, 1
    %p361 = por %p359, %p360
    %p363 = scmp.ne.s32.totalorder %s346, %s362
    %p364 = scmp.eq.s32.totalorder %s26, 0
    %p365 = por %p363, %p364
    %s366 = ssub.s32 %s20, %s27
    %p367 = scmp.eq.s32.totalorder %s366, 0
    %s369 = sadd.s32 %s368, 1
    %s370 = scalar_select %p367, %s368, %s369
    %p373 = pneg %p367
    %p374 = scmp.eq.s32.totalorder %s20, 1
    %p375 = por %p373, %p374
    %p376 = scmp.ne.s32.totalorder %s368, %s371
    %p377 = scmp.eq.s32.totalorder %s20, 0
    %p378 = por %p376, %p377
    %p379 = scmp.ne.s32.totalorder %s368, %s371
    %p380 = scmp.eq.s32.totalorder %s25, 1
    %p381 = por %p379, %p380
    %p382 = scmp.ne.s32.totalorder %s371, %s372
    %p383 = scmp.eq.s32.totalorder %s25, 0
    %p384 = por %p382, %p383
    %p385 = scmp.ne.s32.totalorder %s371, %s372
    %p386 = scmp.eq.s32.totalorder %s26, 1
    %p387 = por %p385, %p386
    %p389 = scmp.ne.s32.totalorder %s372, %s388
    %p390 = scmp.eq.s32.totalorder %s26, 0
    %p391 = por %p389, %p390
    %p392 = scmp.le.s32.totalorder 1, %s20
    %p393 = scmp.lt.s32.totalorder %s20, 3
    %p394 = pnand %p392, %p393
    %p395 = pneg %p394
    // Predicated region
    $region9: #{net_forward.1} parent=5 // pred_check
      _
    $region10: #{net_forward.1} parent=5 // pred_check_branch
      %397 = sbr.rel (%p394) target = $region12
    $region11: #{net_forward.1} parent=5 // pred_region
      %s398 = ssub.s32 %s20, 1
    $region12: #{net_forward.1} parent=5 // pred_fallthru
      _
    %p399 = scmp.lt.s32.totalorder %s20, 2
    // Predicated region
    $region13: #{net_forward.1} parent=5 // pred_check
      %p400 = pneg %p399
    $region14: #{net_forward.1} parent=5 // pred_check_branch
      %402 = sbr.rel (%p400) target = $region16
    $region15: #{net_forward.1} parent=5 // pred_region
      // Predicated region
      $region17: #{net_forward.1} parent=15 // pred_check
        %p403 = pneg %p40
      $region18: #{net_forward.1} parent=15 // pred_check_branch
        %405 = sbr.rel (%p403) target = $region20
      $region19: #{net_forward.1} parent=15 // pred_region
        %p406 = scmp.lt.s32.totalorder %s20, 1
        %s407 = scalar_select %p406, %s20, 1
        %s408 = smul.addr %s407, 16
        %s409 = smul.addr %s408, 8
        %s410 = scalar_lea.vmem %s0, %s409
      $region20: #{net_forward.1} parent=15 // pred_fallthru
        _
      // Predicated region
      $region21: #{net_forward.1} parent=15 // pred_check
        %p411 = pneg %p66
      $region22: #{net_forward.1} parent=15 // pred_check_branch
        %413 = sbr.rel (%p411) target = $region24
      $region23: #{net_forward.1} parent=15 // pred_region
        %p414 = scmp.lt.s32.totalorder %s20, 1
        %s415 = scalar_select %p414, %s20, 1
        %s416 = smul.addr %s415, 16
        %s417 = smul.addr %s416, 8
        %s418 = scalar_lea.vmem %s1, %s417
      $region24: #{net_forward.1} parent=15 // pred_fallthru
        _
      // Predicated region
      $region25: #{net_forward.1} parent=15 // pred_check
        %p419 = pneg %p92
      $region26: #{net_forward.1} parent=15 // pred_check_branch
        %421 = sbr.rel (%p419) target = $region28
      $region27: #{net_forward.1} parent=15 // pred_region
        %p422 = scmp.lt.s32.totalorder %s20, 1
        %s423 = scalar_select %p422, %s20, 1
        %s424 = scalar_lea.vmem %s2, %s423
      $region28: #{net_forward.1} parent=15 // pred_fallthru
        _
      // Predicated region
      $region29: #{net_forward.1} parent=15 // pred_check
        %p425 = pneg %p118
      $region30: #{net_forward.1} parent=15 // pred_check_branch
        %427 = sbr.rel (%p425) target = $region32
      $region31: #{net_forward.1} parent=15 // pred_region
        %p428 = scmp.lt.s32.totalorder %s20, 1
        %s429 = scalar_select %p428, %s20, 1
        %s430 = smul.addr %s429, 16
        %s431 = smul.addr %s430, 8
        %s432 = scalar_lea.vmem %s3, %s431
      $region32: #{net_forward.1} parent=15 // pred_fallthru
        _
      // Predicated region
      $region33: #{net_forward.1} parent=15 // pred_check
        %p433 = pneg %p144
      $region34: #{net_forward.1} parent=15 // pred_check_branch
        %435 = sbr.rel (%p433) target = $region36
      $region35: #{net_forward.1} parent=15 // pred_region
        %p436 = scmp.lt.s32.totalorder %s20, 1
        %s437 = scalar_select %p436, %s20, 1
        %s438 = scalar_lea.vmem %s4, %s437
      $region36: #{net_forward.1} parent=15 // pred_fallthru
        _
      // Predicated region
      $region37: #{net_forward.1} parent=15 // pred_check
        %p439 = pneg %p170
      $region38: #{net_forward.1} parent=15 // pred_check_branch
        %441 = sbr.rel (%p439) target = $region40
      $region39: #{net_forward.1} parent=15 // pred_region
        %p442 = scmp.lt.s32.totalorder %s20, 1
        %s443 = scalar_select %p442, %s20, 1
        %s444 = smul.addr %s443, 32
        %s445 = smul.addr %s444, 8
        %s446 = scalar_lea.vmem %s5, %s445
      $region40: #{net_forward.1} parent=15 // pred_fallthru
        _
      // Predicated region
      $region41: #{net_forward.1} parent=15 // pred_check
        %p447 = pneg %p196
      $region42: #{net_forward.1} parent=15 // pred_check_branch
        %449 = sbr.rel (%p447) target = $region44
      $region43: #{net_forward.1} parent=15 // pred_region
        %p450 = scmp.lt.s32.totalorder %s20, 1
        %s451 = scalar_select %p450, %s20, 1
        %s452 = smul.addr %s451, 2
        %s453 = scalar_lea.vmem %s6, %s452
      $region44: #{net_forward.1} parent=15 // pred_fallthru
        _
      // Predicated region
      $region45: #{net_forward.1} parent=15 // pred_check
        %p454 = pneg %p222
      $region46: #{net_forward.1} parent=15 // pred_check_branch
        %456 = sbr.rel (%p454) target = $region48
      $region47: #{net_forward.1} parent=15 // pred_region
        %p457 = scmp.lt.s32.totalorder %s20, 1
        %s458 = scalar_select %p457, %s20, 1
        %s459 = smul.addr %s458, 16
        %s460 = smul.addr %s459, 8
        %s461 = scalar_lea.vmem %s7, %s460
      $region48: #{net_forward.1} parent=15 // pred_fallthru
        _
      // Predicated region
      $region49: #{net_forward.1} parent=15 // pred_check
        %p462 = pneg %p248
      $region50: #{net_forward.1} parent=15 // pred_check_branch
        %464 = sbr.rel (%p462) target = $region52
      $region51: #{net_forward.1} parent=15 // pred_region
        %p465 = scmp.lt.s32.totalorder %s20, 1
        %s466 = scalar_select %p465, %s20, 1
        %s467 = scalar_lea.vmem %s8, %s466
      $region52: #{net_forward.1} parent=15 // pred_fallthru
        _
      // Predicated region
      $region53: #{net_forward.1} parent=15 // pred_check
        %p468 = pneg %p274
      $region54: #{net_forward.1} parent=15 // pred_check_branch
        %470 = sbr.rel (%p468) target = $region56
      $region55: #{net_forward.1} parent=15 // pred_region
        %p471 = scmp.lt.s32.totalorder %s20, 1
        %s472 = scalar_select %p471, %s20, 1
        %s473 = smul.addr %s472, 16
        %s474 = smul.addr %s473, 8
        %s475 = scalar_lea.vmem %s9, %s474
      $region56: #{net_forward.1} parent=15 // pred_fallthru
        _
      // Predicated region
      $region57: #{net_forward.1} parent=15 // pred_check
        %p476 = pneg %p300
      $region58: #{net_forward.1} parent=15 // pred_check_branch
        %478 = sbr.rel (%p476) target = $region60
      $region59: #{net_forward.1} parent=15 // pred_region
        %p479 = scmp.lt.s32.totalorder %s20, 1
        %s480 = scalar_select %p479, %s20, 1
        %s481 = scalar_lea.vmem %s10, %s480
      $region60: #{net_forward.1} parent=15 // pred_fallthru
        _
    $region16: #{net_forward.1} parent=5 // pred_fallthru
      _
    %p482 = scmp.le.s32.totalorder 1, %s20
    %p483 = scmp.lt.s32.totalorder %s20, 3
    %p484 = pnand %p482, %p483
    %p485 = pneg %p484
    // Predicated region
    $region61: #{net_forward.1} parent=5 // pred_check
      _
    $region62: #{net_forward.1} parent=5 // pred_check_branch
      %487 = sbr.rel (%p484) target = $region64
    $region63: #{net_forward.1} parent=5 // pred_region
      %s488 = ssub.s32 %s20, 1
      %p489 = scmp.lt.s32.totalorder %s25, 1
      %s490 = scalar_select %p489, %s25, 1
      %s491 = smul.addr %s490, 16
      %s492 = smul.addr %s491, 8
      %s493 = scalar_lea.vmem %s0, %s492
      %p494 = pneg %p46
      %p495 = pneg %p43
      %p496 = scmp.lt.s32.totalorder %s25, 1
      %s497 = scalar_select %p496, %s25, 1
      %s498 = smul.addr %s497, 16
      %s499 = smul.addr %s498, 8
      %s500 = scalar_lea.vmem %s1, %s499
      %p501 = pneg %p72
      %p502 = pneg %p69
      %p503 = scmp.lt.s32.totalorder %s25, 1
      %s504 = scalar_select %p503, %s25, 1
      %s505 = scalar_lea.vmem %s2, %s504
      %p506 = pneg %p98
      %p507 = pneg %p95
      %p508 = scmp.lt.s32.totalorder %s25, 1
      %s509 = scalar_select %p508, %s25, 1
      %s510 = smul.addr %s509, 16
      %s511 = smul.addr %s510, 8
      %s512 = scalar_lea.vmem %s3, %s511
      %p513 = pneg %p124
      %p514 = pneg %p121
      %p515 = scmp.lt.s32.totalorder %s25, 1
      %s516 = scalar_select %p515, %s25, 1
      %s517 = scalar_lea.vmem %s4, %s516
      %p518 = pneg %p150
      %p519 = pneg %p147
      %p520 = scmp.lt.s32.totalorder %s25, 1
      %s521 = scalar_select %p520, %s25, 1
      %s522 = smul.addr %s521, 32
      %s523 = smul.addr %s522, 8
      %s524 = scalar_lea.vmem %s5, %s523
      %p525 = pneg %p176
      %p526 = pneg %p173
      %p527 = scmp.lt.s32.totalorder %s25, 1
      %s528 = scalar_select %p527, %s25, 1
      %s529 = smul.addr %s528, 2
      %s530 = scalar_lea.vmem %s6, %s529
      %p531 = pneg %p202
      %p532 = pneg %p199
      %p533 = scmp.lt.s32.totalorder %s25, 1
      %s534 = scalar_select %p533, %s25, 1
      %s535 = smul.addr %s534, 16
      %s536 = smul.addr %s535, 8
      %s537 = scalar_lea.vmem %s7, %s536
      %p538 = pneg %p228
      %p539 = pneg %p225
      %p540 = scmp.lt.s32.totalorder %s25, 1
      %s541 = scalar_select %p540, %s25, 1
      %s542 = scalar_lea.vmem %s8, %s541
      %p543 = pneg %p254
      %p544 = pneg %p251
      %p545 = scmp.lt.s32.totalorder %s25, 1
      %s546 = scalar_select %p545, %s25, 1
      %s547 = smul.addr %s546, 16
      %s548 = smul.addr %s547, 8
      %s549 = scalar_lea.vmem %s9, %s548
      %p550 = pneg %p280
      %p551 = pneg %p277
      %p552 = scmp.lt.s32.totalorder %s25, 1
      %s553 = scalar_select %p552, %s25, 1
      %s554 = scalar_lea.vmem %s10, %s553
      %p555 = pneg %p306
      %p556 = pneg %p303
      %p557 = pneg %p332
      %p558 = pneg %p329
      %p559 = scmp.lt.s32.totalorder %s25, 1
      %s560 = scalar_select %p559, %s25, 1
      %s561 = smul.addr %s560, 16
      %s562 = smul.addr %s561, 8
      %s563 = scalar_lea.vmem %s11, %s562
      %p564 = pneg %p358
      %p565 = pneg %p355
      %p566 = scmp.lt.s32.totalorder %s25, 1
      %s567 = scalar_select %p566, %s25, 1
      %s568 = smul.addr %s567, 16
      %s569 = smul.addr %s568, 8
      %s570 = scalar_lea.vmem %s12, %s569
      %p571 = pneg %p384
      %p572 = pneg %p381
      %p573 = scmp.lt.s32.totalorder %s25, 1
      %s574 = scalar_select %p573, %s25, 1
      %s575 = smul.addr %s574, 16
      %s576 = smul.addr %s575, 8
      %s577 = scalar_lea.vmem %s13, %s576
      %p578 = scmp.lt.s32.totalorder %s25, 1
      %s579 = scalar_select %p578, %s25, 1
      %s580 = smul.addr %s579, 16
      %s581 = smul.addr %s580, 8
      %s582 = scalar_lea.vmem %s0, %s581
      %p583 = scmp.lt.s32.totalorder %s25, 1
      %s584 = scalar_select %p583, %s25, 1
      %s585 = smul.addr %s584, 16
      %s586 = smul.addr %s585, 8
      %s587 = scalar_lea.vmem %s1, %s586
      %p588 = scmp.lt.s32.totalorder %s25, 1
      %s589 = scalar_select %p588, %s25, 1
      %s590 = scalar_lea.vmem %s2, %s589
      %p591 = scmp.lt.s32.totalorder %s25, 1
      %s592 = scalar_select %p591, %s25, 1
      %s593 = smul.addr %s592, 16
      %s594 = smul.addr %s593, 8
      %s595 = scalar_lea.vmem %s3, %s594
      %p596 = scmp.lt.s32.totalorder %s25, 1
      %s597 = scalar_select %p596, %s25, 1
      %s598 = scalar_lea.vmem %s4, %s597
      %p599 = scmp.lt.s32.totalorder %s25, 1
      %s600 = scalar_select %p599, %s25, 1
      %s601 = smul.addr %s600, 32
      %s602 = smul.addr %s601, 8
      %s603 = scalar_lea.vmem %s5, %s602
      %p604 = scmp.lt.s32.totalorder %s25, 1
      %s605 = scalar_select %p604, %s25, 1
      %s606 = smul.addr %s605, 2
      %s607 = scalar_lea.vmem %s6, %s606
      %p608 = scmp.lt.s32.totalorder %s25, 1
      %s609 = scalar_select %p608, %s25, 1
      %s610 = smul.addr %s609, 16
      %s611 = smul.addr %s610, 8
      %s612 = scalar_lea.vmem %s7, %s611
      %p613 = scmp.lt.s32.totalorder %s25, 1
      %s614 = scalar_select %p613, %s25, 1
      %s615 = scalar_lea.vmem %s8, %s614
      %p616 = scmp.lt.s32.totalorder %s25, 1
      %s617 = scalar_select %p616, %s25, 1
      %s618 = smul.addr %s617, 16
      %s619 = smul.addr %s618, 8
      %s620 = scalar_lea.vmem %s9, %s619
      %p621 = scmp.lt.s32.totalorder %s25, 1
      %s622 = scalar_select %p621, %s25, 1
      %s623 = scalar_lea.vmem %s10, %s622
      %p624 = scmp.lt.s32.totalorder %s25, 1
      %s625 = scalar_select %p624, %s25, 1
      %s626 = smul.addr %s625, 16
      %s627 = smul.addr %s626, 8
      %s628 = scalar_lea.vmem %s11, %s627
      %p629 = scmp.lt.s32.totalorder %s25, 1
      %s630 = scalar_select %p629, %s25, 1
      %s631 = smul.addr %s630, 16
      %s632 = smul.addr %s631, 8
      %s633 = scalar_lea.vmem %s12, %s632
      %p634 = scmp.lt.s32.totalorder %s25, 1
      %s635 = scalar_select %p634, %s25, 1
      %s636 = smul.addr %s635, 16
      %s637 = smul.addr %s636, 8
      %s638 = scalar_lea.vmem %s13, %s637
      %v639 = vld [vmem:[%s582] sm:$0xff]
      %v640 = vld [vmem:[%s582 + $0x8] sm:$0xff]
      %v641 = vld [vmem:[%s582 + $0x10] sm:$0xff]
      %v642 = vld [vmem:[%s582 + $0x18] sm:$0xff]
      %v643 = vld [vmem:[%s582 + $0x20] sm:$0xff]
      %v644 = vld [vmem:[%s582 + $0x28] sm:$0xff]
      %v645 = vld [vmem:[%s582 + $0x30] sm:$0xff]
      %v646 = vld [vmem:[%s582 + $0x38] sm:$0xff]
      %v647 = vld [vmem:[%s582 + $0x40] sm:$0xff]
      %v648 = vld [vmem:[%s582 + $0x48] sm:$0xff]
      %v649 = vld [vmem:[%s582 + $0x50] sm:$0xff]
      %v650 = vld [vmem:[%s582 + $0x58] sm:$0xff]
      %v651 = vld [vmem:[%s582 + $0x60] sm:$0xff]
      %v652 = vld [vmem:[%s582 + $0x68] sm:$0xff]
      %v653 = vld [vmem:[%s582 + $0x70] sm:$0xff]
      %v654 = vld [vmem:[%s582 + $0x78] sm:$0xff]
      %v655 = vmul.f32 %v639, %v639
      %v656 = vmul.f32 %v640, %v640
      %v657 = vmul.f32 %v641, %v641
      %v658 = vmul.f32 %v642, %v642
      %v659 = vmul.f32 %v643, %v643
      %v660 = vmul.f32 %v644, %v644
      %v661 = vmul.f32 %v645, %v645
      %v662 = vmul.f32 %v646, %v646
      %v663 = vmul.f32 %v647, %v647
      %v664 = vmul.f32 %v648, %v648
      %v665 = vmul.f32 %v649, %v649
      %v666 = vmul.f32 %v650, %v650
      %v667 = vmul.f32 %v651, %v651
      %v668 = vmul.f32 %v652, %v652
      %v669 = vmul.f32 %v653, %v653
      %v670 = vmul.f32 %v654, %v654
      %671 = vadd.xlane.f32.xlu0 %v655
      %v672 = vpop.xlane.xlu0 %671
      %673 = vadd.xlane.f32.xlu0 %v656
      %v674 = vpop.xlane.xlu0 %673
      %675 = vadd.xlane.f32.xlu0 %v657
      %v676 = vpop.xlane.xlu0 %675
      %677 = vadd.xlane.f32.xlu0 %v658
      %v678 = vpop.xlane.xlu0 %677
      %679 = vadd.xlane.f32.xlu0 %v659
      %v680 = vpop.xlane.xlu0 %679
      %681 = vadd.xlane.f32.xlu0 %v660
      %v682 = vpop.xlane.xlu0 %681
      %683 = vadd.xlane.f32.xlu0 %v661
      %v684 = vpop.xlane.xlu0 %683
      %685 = vadd.xlane.f32.xlu0 %v662
      %v686 = vpop.xlane.xlu0 %685
      %687 = vadd.xlane.f32.xlu0 %v663
      %v688 = vpop.xlane.xlu0 %687
      %689 = vadd.xlane.f32.xlu0 %v664
      %v690 = vpop.xlane.xlu0 %689
      %691 = vadd.xlane.f32.xlu0 %v665
      %v692 = vpop.xlane.xlu0 %691
      %693 = vadd.xlane.f32.xlu0 %v666
      %v694 = vpop.xlane.xlu0 %693
      %695 = vadd.xlane.f32.xlu0 %v667
      %v696 = vpop.xlane.xlu0 %695
      %697 = vadd.xlane.f32.xlu0 %v668
      %v698 = vpop.xlane.xlu0 %697
      %699 = vadd.xlane.f32.xlu0 %v669
      %v700 = vpop.xlane.xlu0 %699
      %701 = vadd.xlane.f32.xlu0 %v670
      %v702 = vpop.xlane.xlu0 %701
      %v703 = vmax.f32 %v672, 1e-16
      %v704 = vmax.f32 %v674, 1e-16
      %v705 = vmax.f32 %v676, 1e-16
      %v706 = vmax.f32 %v678, 1e-16
      %v707 = vmax.f32 %v680, 1e-16
      %v708 = vmax.f32 %v682, 1e-16
      %v709 = vmax.f32 %v684, 1e-16
      %v710 = vmax.f32 %v686, 1e-16
      %v711 = vmax.f32 %v688, 1e-16
      %v712 = vmax.f32 %v690, 1e-16
      %v713 = vmax.f32 %v692, 1e-16
      %v714 = vmax.f32 %v694, 1e-16
      %v715 = vmax.f32 %v696, 1e-16
      %v716 = vmax.f32 %v698, 1e-16
      %v717 = vmax.f32 %v700, 1e-16
      %v718 = vmax.f32 %v702, 1e-16
      %v719 = vrsqrt.pop %v703
      %v720 = vmul.f32 %v719, %v703
      %v721 = vmul.f32 %v720, %v719
      %v722 = vmul.f32 0.5, %v721
      %v723 = vsub.f32 1.5, %v722
      %v724 = vmul.f32 %v719, %v723
      %vm725 = vweird.f32 %v703
      %vm726 = vweird.f32 %v719
      %vm727 = vmor %vm725, %vm726
      %v728 = vsel %vm727, %v719, %v724
      %v729 = vrsqrt.pop %v704
      %v730 = vmul.f32 %v729, %v704
      %v731 = vmul.f32 %v730, %v729
      %v732 = vmul.f32 0.5, %v731
      %v733 = vsub.f32 1.5, %v732
      %v734 = vmul.f32 %v729, %v733
      %vm735 = vweird.f32 %v704
      %vm736 = vweird.f32 %v729
      %vm737 = vmor %vm735, %vm736
      %v738 = vsel %vm737, %v729, %v734
      %v739 = vrsqrt.pop %v705
      %v740 = vmul.f32 %v739, %v705
      %v741 = vmul.f32 %v740, %v739
      %v742 = vmul.f32 0.5, %v741
      %v743 = vsub.f32 1.5, %v742
      %v744 = vmul.f32 %v739, %v743
      %vm745 = vweird.f32 %v705
      %vm746 = vweird.f32 %v739
      %vm747 = vmor %vm745, %vm746
      %v748 = vsel %vm747, %v739, %v744
      %v749 = vrsqrt.pop %v706
      %v750 = vmul.f32 %v749, %v706
      %v751 = vmul.f32 %v750, %v749
      %v752 = vmul.f32 0.5, %v751
      %v753 = vsub.f32 1.5, %v752
      %v754 = vmul.f32 %v749, %v753
      %vm755 = vweird.f32 %v706
      %vm756 = vweird.f32 %v749
      %vm757 = vmor %vm755, %vm756
      %v758 = vsel %vm757, %v749, %v754
      %v759 = vrsqrt.pop %v707
      %v760 = vmul.f32 %v759, %v707
      %v761 = vmul.f32 %v760, %v759
      %v762 = vmul.f32 0.5, %v761
      %v763 = vsub.f32 1.5, %v762
      %v764 = vmul.f32 %v759, %v763
      %vm765 = vweird.f32 %v707
      %vm766 = vweird.f32 %v759
      %vm767 = vmor %vm765, %vm766
      %v768 = vsel %vm767, %v759, %v764
      %v769 = vrsqrt.pop %v708
      %v770 = vmul.f32 %v769, %v708
      %v771 = vmul.f32 %v770, %v769
      %v772 = vmul.f32 0.5, %v771
      %v773 = vsub.f32 1.5, %v772
      %v774 = vmul.f32 %v769, %v773
      %vm775 = vweird.f32 %v708
      %vm776 = vweird.f32 %v769
      %vm777 = vmor %vm775, %vm776
      %v778 = vsel %vm777, %v769, %v774
      %v779 = vrsqrt.pop %v709
      %v780 = vmul.f32 %v779, %v709
      %v781 = vmul.f32 %v780, %v779
      %v782 = vmul.f32 0.5, %v781
      %v783 = vsub.f32 1.5, %v782
      %v784 = vmul.f32 %v779, %v783
      %vm785 = vweird.f32 %v709
      %vm786 = vweird.f32 %v779
      %vm787 = vmor %vm785, %vm786
      %v788 = vsel %vm787, %v779, %v784
      %v789 = vrsqrt.pop %v710
      %v790 = vmul.f32 %v789, %v710
      %v791 = vmul.f32 %v790, %v789
      %v792 = vmul.f32 0.5, %v791
      %v793 = vsub.f32 1.5, %v792
      %v794 = vmul.f32 %v789, %v793
      %vm795 = vweird.f32 %v710
      %vm796 = vweird.f32 %v789
      %vm797 = vmor %vm795, %vm796
      %v798 = vsel %vm797, %v789, %v794
      %v799 = vrsqrt.pop %v711
      %v800 = vmul.f32 %v799, %v711
      %v801 = vmul.f32 %v800, %v799
      %v802 = vmul.f32 0.5, %v801
      %v803 = vsub.f32 1.5, %v802
      %v804 = vmul.f32 %v799, %v803
      %vm805 = vweird.f32 %v711
      %vm806 = vweird.f32 %v799
      %vm807 = vmor %vm805, %vm806
      %v808 = vsel %vm807, %v799, %v804
      %v809 = vrsqrt.pop %v712
      %v810 = vmul.f32 %v809, %v712
      %v811 = vmul.f32 %v810, %v809
      %v812 = vmul.f32 0.5, %v811
      %v813 = vsub.f32 1.5, %v812
      %v814 = vmul.f32 %v809, %v813
      %vm815 = vweird.f32 %v712
      %vm816 = vweird.f32 %v809
      %vm817 = vmor %vm815, %vm816
      %v818 = vsel %vm817, %v809, %v814
      %v819 = vrsqrt.pop %v713
      %v820 = vmul.f32 %v819, %v713
      %v821 = vmul.f32 %v820, %v819
      %v822 = vmul.f32 0.5, %v821
      %v823 = vsub.f32 1.5, %v822
      %v824 = vmul.f32 %v819, %v823
      %vm825 = vweird.f32 %v713
      %vm826 = vweird.f32 %v819
      %vm827 = vmor %vm825, %vm826
      %v828 = vsel %vm827, %v819, %v824
      %v829 = vrsqrt.pop %v714
      %v830 = vmul.f32 %v829, %v714
      %v831 = vmul.f32 %v830, %v829
      %v832 = vmul.f32 0.5, %v831
      %v833 = vsub.f32 1.5, %v832
      %v834 = vmul.f32 %v829, %v833
      %vm835 = vweird.f32 %v714
      %vm836 = vweird.f32 %v829
      %vm837 = vmor %vm835, %vm836
      %v838 = vsel %vm837, %v829, %v834
      %v839 = vrsqrt.pop %v715
      %v840 = vmul.f32 %v839, %v715
      %v841 = vmul.f32 %v840, %v839
      %v842 = vmul.f32 0.5, %v841
      %v843 = vsub.f32 1.5, %v842
      %v844 = vmul.f32 %v839, %v843
      %vm845 = vweird.f32 %v715
      %vm846 = vweird.f32 %v839
      %vm847 = vmor %vm845, %vm846
      %v848 = vsel %vm847, %v839, %v844
      %v849 = vrsqrt.pop %v716
      %v850 = vmul.f32 %v849, %v716
      %v851 = vmul.f32 %v850, %v849
      %v852 = vmul.f32 0.5, %v851
      %v853 = vsub.f32 1.5, %v852
      %v854 = vmul.f32 %v849, %v853
      %vm855 = vweird.f32 %v716
      %vm856 = vweird.f32 %v849
      %vm857 = vmor %vm855, %vm856
      %v858 = vsel %vm857, %v849, %v854
      %v859 = vrsqrt.pop %v717
      %v860 = vmul.f32 %v859, %v717
      %v861 = vmul.f32 %v860, %v859
      %v862 = vmul.f32 0.5, %v861
      %v863 = vsub.f32 1.5, %v862
      %v864 = vmul.f32 %v859, %v863
      %vm865 = vweird.f32 %v717
      %vm866 = vweird.f32 %v859
      %vm867 = vmor %vm865, %vm866
      %v868 = vsel %vm867, %v859, %v864
      %v869 = vrsqrt.pop %v718
      %v870 = vmul.f32 %v869, %v718
      %v871 = vmul.f32 %v870, %v869
      %v872 = vmul.f32 0.5, %v871
      %v873 = vsub.f32 1.5, %v872
      %v874 = vmul.f32 %v869, %v873
      %vm875 = vweird.f32 %v718
      %vm876 = vweird.f32 %v869
      %vm877 = vmor %vm875, %vm876
      %v878 = vsel %vm877, %v869, %v874
      %v879 = vmul.f32 %v639, %v728
      %v880 = vmul.f32 %v640, %v738
      %v881 = vmul.f32 %v641, %v748
      %v882 = vmul.f32 %v642, %v758
      %v883 = vmul.f32 %v643, %v768
      %v884 = vmul.f32 %v644, %v778
      %v885 = vmul.f32 %v645, %v788
      %v886 = vmul.f32 %v646, %v798
      %v887 = vmul.f32 %v647, %v808
      %v888 = vmul.f32 %v648, %v818
      %v889 = vmul.f32 %v649, %v828
      %v890 = vmul.f32 %v650, %v838
      %v891 = vmul.f32 %v651, %v848
      %v892 = vmul.f32 %v652, %v858
      %v893 = vmul.f32 %v653, %v868
      %v894 = vmul.f32 %v654, %v878
      %v895 = vld [vmem:[%s587] sm:$0xff]
      %v896 = vld [vmem:[%s587 + $0x8] sm:$0xff]
      %v897 = vld [vmem:[%s587 + $0x10] sm:$0xff]
      %v898 = vld [vmem:[%s587 + $0x18] sm:$0xff]
      %v899 = vld [vmem:[%s587 + $0x20] sm:$0xff]
      %v900 = vld [vmem:[%s587 + $0x28] sm:$0xff]
      %v901 = vld [vmem:[%s587 + $0x30] sm:$0xff]
      %v902 = vld [vmem:[%s587 + $0x38] sm:$0xff]
      %v903 = vld [vmem:[%s587 + $0x40] sm:$0xff]
      %v904 = vld [vmem:[%s587 + $0x48] sm:$0xff]
      %v905 = vld [vmem:[%s587 + $0x50] sm:$0xff]
      %v906 = vld [vmem:[%s587 + $0x58] sm:$0xff]
      %v907 = vld [vmem:[%s587 + $0x60] sm:$0xff]
      %v908 = vld [vmem:[%s587 + $0x68] sm:$0xff]
      %v909 = vld [vmem:[%s587 + $0x70] sm:$0xff]
      %v910 = vld [vmem:[%s587 + $0x78] sm:$0xff]
      %v911 = vld [vmem:[%s590] sm:$0x1]
      %v913 = vperm.slane %v911, 0
      %915 = vmatpush.msra.mxu0 %v910
      %916 = vmatpush.msra.mxu0 %v909
      %917 = vmatpush.msra.mxu0 %v908
      %918 = vmatpush.msra.mxu0 %v907
      %919 = vmatpush.msra.mxu0 %v906
      %920 = vmatpush.msra.mxu0 %v905
      %921 = vmatpush.msra.mxu0 %v904
      %922 = vmatpush.msra.mxu0 %v903
      %923 = vmatpush.msra.mxu0 %v902
      %924 = vmatpush.msra.mxu0 %v901
      %925 = vmatpush.msra.mxu0 %v900
      %926 = vmatpush.msra.mxu0 %v899
      %927 = vmatpush.msra.mxu0 %v898
      %928 = vmatpush.msra.mxu0 %v897
      %929 = vmatpush.msra.mxu0 %v896
      %930 = vmatpush.msra.mxu0 %v895
      %931 = vmatmul.f32.gmra.mxu0 %v879
      %v932 = vpop.f32.mrf.mxu0
      %v933 = vadd.f32 %v913, %v932
      %934 = vmatmul.f32.gmra.mxu0 %v880
      %v935 = vpop.f32.mrf.mxu0
      %v936 = vadd.f32 %v913, %v935
      %937 = vmatmul.f32.gmra.mxu0 %v881
      %v938 = vpop.f32.mrf.mxu0
      %v939 = vadd.f32 %v913, %v938
      %940 = vmatmul.f32.gmra.mxu0 %v882
      %v941 = vpop.f32.mrf.mxu0
      %v942 = vadd.f32 %v913, %v941
      %943 = vmatmul.f32.gmra.mxu0 %v883
      %v944 = vpop.f32.mrf.mxu0
      %v945 = vadd.f32 %v913, %v944
      %946 = vmatmul.f32.gmra.mxu0 %v884
      %v947 = vpop.f32.mrf.mxu0
      %v948 = vadd.f32 %v913, %v947
      %949 = vmatmul.f32.gmra.mxu0 %v885
      %v950 = vpop.f32.mrf.mxu0
      %v951 = vadd.f32 %v913, %v950
      %952 = vmatmul.f32.gmra.mxu0 %v886
      %v953 = vpop.f32.mrf.mxu0
      %v954 = vadd.f32 %v913, %v953
      %955 = vmatmul.f32.gmra.mxu0 %v887
      %v956 = vpop.f32.mrf.mxu0
      %v957 = vadd.f32 %v913, %v956
      %958 = vmatmul.f32.gmra.mxu0 %v888
      %v959 = vpop.f32.mrf.mxu0
      %v960 = vadd.f32 %v913, %v959
      %961 = vmatmul.f32.gmra.mxu0 %v889
      %v962 = vpop.f32.mrf.mxu0
      %v963 = vadd.f32 %v913, %v962
      %964 = vmatmul.f32.gmra.mxu0 %v890
      %v965 = vpop.f32.mrf.mxu0
      %v966 = vadd.f32 %v913, %v965
      %967 = vmatmul.f32.gmra.mxu0 %v891
      %v968 = vpop.f32.mrf.mxu0
      %v969 = vadd.f32 %v913, %v968
      %970 = vmatmul.f32.gmra.mxu0 %v892
      %v971 = vpop.f32.mrf.mxu0
      %v972 = vadd.f32 %v913, %v971
      %973 = vmatmul.f32.gmra.mxu0 %v893
      %v974 = vpop.f32.mrf.mxu0
      %v975 = vadd.f32 %v913, %v974
      %976 = vmatmul.f32.gmra.mxu0 %v894
      %v977 = vpop.f32.mrf.mxu0
      %v978 = vadd.f32 %v913, %v977
      %979 = vdwg.mxu0
      %v980 = vtanh.pop %v933
      %v981 = vtanh.pop %v936
      %v982 = vtanh.pop %v939
      %v983 = vtanh.pop %v942
      %v984 = vtanh.pop %v945
      %v985 = vtanh.pop %v948
      %v986 = vtanh.pop %v951
      %v987 = vtanh.pop %v954
      %v988 = vtanh.pop %v957
      %v989 = vtanh.pop %v960
      %v990 = vtanh.pop %v963
      %v991 = vtanh.pop %v966
      %v992 = vtanh.pop %v969
      %v993 = vtanh.pop %v972
      %v994 = vtanh.pop %v975
      %v995 = vtanh.pop %v978
      %v996 = vld [vmem:[%s595] sm:$0xff]
      %v997 = vld [vmem:[%s595 + $0x8] sm:$0xff]
      %v998 = vld [vmem:[%s595 + $0x10] sm:$0xff]
      %v999 = vld [vmem:[%s595 + $0x18] sm:$0xff]
      %v1000 = vld [vmem:[%s595 + $0x20] sm:$0xff]
      %v1001 = vld [vmem:[%s595 + $0x28] sm:$0xff]
      %v1002 = vld [vmem:[%s595 + $0x30] sm:$0xff]
      %v1003 = vld [vmem:[%s595 + $0x38] sm:$0xff]
      %v1004 = vld [vmem:[%s595 + $0x40] sm:$0xff]
      %v1005 = vld [vmem:[%s595 + $0x48] sm:$0xff]
      %v1006 = vld [vmem:[%s595 + $0x50] sm:$0xff]
      %v1007 = vld [vmem:[%s595 + $0x58] sm:$0xff]
      %v1008 = vld [vmem:[%s595 + $0x60] sm:$0xff]
      %v1009 = vld [vmem:[%s595 + $0x68] sm:$0xff]
      %v1010 = vld [vmem:[%s595 + $0x70] sm:$0xff]
      %v1011 = vld [vmem:[%s595 + $0x78] sm:$0xff]
      %v1012 = vld [vmem:[%s598] sm:$0x1]
      %v1014 = vperm.slane %v1012, 0
      %1016 = vmatpush.msra.mxu0 %v1011
      %1017 = vmatpush.msra.mxu0 %v1010
      %1018 = vmatpush.msra.mxu0 %v1009
      %1019 = vmatpush.msra.mxu0 %v1008
      %1020 = vmatpush.msra.mxu0 %v1007
      %1021 = vmatpush.msra.mxu0 %v1006
      %1022 = vmatpush.msra.mxu0 %v1005
      %1023 = vmatpush.msra.mxu0 %v1004
      %1024 = vmatpush.msra.mxu0 %v1003
      %1025 = vmatpush.msra.mxu0 %v1002
      %1026 = vmatpush.msra.mxu0 %v1001
      %1027 = vmatpush.msra.mxu0 %v1000
      %1028 = vmatpush.msra.mxu0 %v999
      %1029 = vmatpush.msra.mxu0 %v998
      %1030 = vmatpush.msra.mxu0 %v997
      %1031 = vmatpush.msra.mxu0 %v996
      %1032 = vmatmul.f32.gmra.mxu0 %v980
      %v1033 = vpop.f32.mrf.mxu0
      %v1034 = vadd.f32 %v1014, %v1033
      %1035 = vmatmul.f32.gmra.mxu0 %v981
      %v1036 = vpop.f32.mrf.mxu0
      %v1037 = vadd.f32 %v1014, %v1036
      %1038 = vmatmul.f32.gmra.mxu0 %v982
      %v1039 = vpop.f32.mrf.mxu0
      %v1040 = vadd.f32 %v1014, %v1039
      %1041 = vmatmul.f32.gmra.mxu0 %v983
      %v1042 = vpop.f32.mrf.mxu0
      %v1043 = vadd.f32 %v1014, %v1042
      %1044 = vmatmul.f32.gmra.mxu0 %v984
      %v1045 = vpop.f32.mrf.mxu0
      %v1046 = vadd.f32 %v1014, %v1045
      %1047 = vmatmul.f32.gmra.mxu0 %v985
      %v1048 = vpop.f32.mrf.mxu0
      %v1049 = vadd.f32 %v1014, %v1048
      %1050 = vmatmul.f32.gmra.mxu0 %v986
      %v1051 = vpop.f32.mrf.mxu0
      %v1052 = vadd.f32 %v1014, %v1051
      %1053 = vmatmul.f32.gmra.mxu0 %v987
      %v1054 = vpop.f32.mrf.mxu0
      %v1055 = vadd.f32 %v1014, %v1054
      %1056 = vmatmul.f32.gmra.mxu0 %v988
      %v1057 = vpop.f32.mrf.mxu0
      %v1058 = vadd.f32 %v1014, %v1057
      %1059 = vmatmul.f32.gmra.mxu0 %v989
      %v1060 = vpop.f32.mrf.mxu0
      %v1061 = vadd.f32 %v1014, %v1060
      %1062 = vmatmul.f32.gmra.mxu0 %v990
      %v1063 = vpop.f32.mrf.mxu0
      %v1064 = vadd.f32 %v1014, %v1063
      %1065 = vmatmul.f32.gmra.mxu0 %v991
      %v1066 = vpop.f32.mrf.mxu0
      %v1067 = vadd.f32 %v1014, %v1066
      %1068 = vmatmul.f32.gmra.mxu0 %v992
      %v1069 = vpop.f32.mrf.mxu0
      %v1070 = vadd.f32 %v1014, %v1069
      %1071 = vmatmul.f32.gmra.mxu0 %v993
      %v1072 = vpop.f32.mrf.mxu0
      %v1073 = vadd.f32 %v1014, %v1072
      %1074 = vmatmul.f32.gmra.mxu0 %v994
      %v1075 = vpop.f32.mrf.mxu0
      %v1076 = vadd.f32 %v1014, %v1075
      %1077 = vmatmul.f32.gmra.mxu0 %v995
      %v1078 = vpop.f32.mrf.mxu0
      %v1079 = vadd.f32 %v1014, %v1078
      %1080 = vdwg.mxu0
      %v1081 = vtanh.pop %v1034
      %v1082 = vtanh.pop %v1037
      %v1083 = vtanh.pop %v1040
      %v1084 = vtanh.pop %v1043
      %v1085 = vtanh.pop %v1046
      %v1086 = vtanh.pop %v1049
      %v1087 = vtanh.pop %v1052
      %v1088 = vtanh.pop %v1055
      %v1089 = vtanh.pop %v1058
      %v1090 = vtanh.pop %v1061
      %v1091 = vtanh.pop %v1064
      %v1092 = vtanh.pop %v1067
      %v1093 = vtanh.pop %v1070
      %v1094 = vtanh.pop %v1073
      %v1095 = vtanh.pop %v1076
      %v1096 = vtanh.pop %v1079
      %v1097 = vld [vmem:[%s603] sm:$0xff]
      %v1098 = vld [vmem:[%s603 + $0x8] sm:$0xff]
      %v1099 = vld [vmem:[%s603 + $0x10] sm:$0xff]
      %v1100 = vld [vmem:[%s603 + $0x18] sm:$0xff]
      %v1101 = vld [vmem:[%s603 + $0x20] sm:$0xff]
      %v1102 = vld [vmem:[%s603 + $0x28] sm:$0xff]
      %v1103 = vld [vmem:[%s603 + $0x30] sm:$0xff]
      %v1104 = vld [vmem:[%s603 + $0x38] sm:$0xff]
      %v1105 = vld [vmem:[%s603 + $0x40] sm:$0xff]
      %v1106 = vld [vmem:[%s603 + $0x48] sm:$0xff]
      %v1107 = vld [vmem:[%s603 + $0x50] sm:$0xff]
      %v1108 = vld [vmem:[%s603 + $0x58] sm:$0xff]
      %v1109 = vld [vmem:[%s603 + $0x60] sm:$0xff]
      %v1110 = vld [vmem:[%s603 + $0x68] sm:$0xff]
      %v1111 = vld [vmem:[%s603 + $0x70] sm:$0xff]
      %v1112 = vld [vmem:[%s603 + $0x78] sm:$0xff]
      %v1113 = vld [vmem:[%s603 + $0x80] sm:$0xff]
      %v1114 = vld [vmem:[%s603 + $0x88] sm:$0xff]
      %v1115 = vld [vmem:[%s603 + $0x90] sm:$0xff]
      %v1116 = vld [vmem:[%s603 + $0x98] sm:$0xff]
      %v1117 = vld [vmem:[%s603 + $0xa0] sm:$0xff]
      %v1118 = vld [vmem:[%s603 + $0xa8] sm:$0xff]
      %v1119 = vld [vmem:[%s603 + $0xb0] sm:$0xff]
      %v1120 = vld [vmem:[%s603 + $0xb8] sm:$0xff]
      %v1121 = vld [vmem:[%s603 + $0xc0] sm:$0xff]
      %v1122 = vld [vmem:[%s603 + $0xc8] sm:$0xff]
      %v1123 = vld [vmem:[%s603 + $0xd0] sm:$0xff]
      %v1124 = vld [vmem:[%s603 + $0xd8] sm:$0xff]
      %v1125 = vld [vmem:[%s603 + $0xe0] sm:$0xff]
      %v1126 = vld [vmem:[%s603 + $0xe8] sm:$0xff]
      %v1127 = vld [vmem:[%s603 + $0xf0] sm:$0xff]
      %v1128 = vld [vmem:[%s603 + $0xf8] sm:$0xff]
      %v1129 = vld [vmem:[%s607] sm:$0x3]
      %v1131 = vperm.slane %v1129, 0
      %v1132 = vperm.slane %v1129, 1
      %1135 = vmatpush.xpose.msra.mxu0 %v1112
      %1136 = vmatpush.xpose.msra.mxu0 %v1111
      %1137 = vmatpush.xpose.msra.mxu0 %v1110
      %1138 = vmatpush.xpose.msra.mxu0 %v1109
      %1139 = vmatpush.xpose.msra.mxu0 %v1108
      %1140 = vmatpush.xpose.msra.mxu0 %v1107
      %1141 = vmatpush.xpose.msra.mxu0 %v1106
      %1142 = vmatpush.xpose.msra.mxu0 %v1105
      %1143 = vmatpush.xpose.msra.mxu0 %v1104
      %1144 = vmatpush.xpose.msra.mxu0 %v1103
      %1145 = vmatpush.xpose.msra.mxu0 %v1102
      %1146 = vmatpush.xpose.msra.mxu0 %v1101
      %1147 = vmatpush.xpose.msra.mxu0 %v1100
      %1148 = vmatpush.xpose.msra.mxu0 %v1099
      %1149 = vmatpush.xpose.msra.mxu0 %v1098
      %1150 = vmatpush.xpose.msra.mxu0 %v1097
      %1151 = vmatmul.f32.gmra.mxu0 %v1081
      %v1152 = vpop.f32.mrf.mxu0
      %v1153 = vadd.f32 %v1131, %v1152
      %1154 = vmatmul.f32.gmra.mxu0 %v1082
      %v1155 = vpop.f32.mrf.mxu0
      %v1156 = vadd.f32 %v1131, %v1155
      %1157 = vmatmul.f32.gmra.mxu0 %v1083
      %v1158 = vpop.f32.mrf.mxu0
      %v1159 = vadd.f32 %v1131, %v1158
      %1160 = vmatmul.f32.gmra.mxu0 %v1084
      %v1161 = vpop.f32.mrf.mxu0
      %v1162 = vadd.f32 %v1131, %v1161
      %1163 = vmatmul.f32.gmra.mxu0 %v1085
      %v1164 = vpop.f32.mrf.mxu0
      %v1165 = vadd.f32 %v1131, %v1164
      %1166 = vmatmul.f32.gmra.mxu0 %v1086
      %v1167 = vpop.f32.mrf.mxu0
      %v1168 = vadd.f32 %v1131, %v1167
      %1169 = vmatmul.f32.gmra.mxu0 %v1087
      %v1170 = vpop.f32.mrf.mxu0
      %v1171 = vadd.f32 %v1131, %v1170
      %1172 = vmatmul.f32.gmra.mxu0 %v1088
      %v1173 = vpop.f32.mrf.mxu0
      %v1174 = vadd.f32 %v1131, %v1173
      %1175 = vmatmul.f32.gmra.mxu0 %v1089
      %v1176 = vpop.f32.mrf.mxu0
      %v1177 = vadd.f32 %v1131, %v1176
      %1178 = vmatmul.f32.gmra.mxu0 %v1090
      %v1179 = vpop.f32.mrf.mxu0
      %v1180 = vadd.f32 %v1131, %v1179
      %1181 = vmatmul.f32.gmra.mxu0 %v1091
      %v1182 = vpop.f32.mrf.mxu0
      %v1183 = vadd.f32 %v1131, %v1182
      %1184 = vmatmul.f32.gmra.mxu0 %v1092
      %v1185 = vpop.f32.mrf.mxu0
      %v1186 = vadd.f32 %v1131, %v1185
      %1187 = vmatmul.f32.gmra.mxu0 %v1093
      %v1188 = vpop.f32.mrf.mxu0
      %v1189 = vadd.f32 %v1131, %v1188
      %1190 = vmatmul.f32.gmra.mxu0 %v1094
      %v1191 = vpop.f32.mrf.mxu0
      %v1192 = vadd.f32 %v1131, %v1191
      %1193 = vmatmul.f32.gmra.mxu0 %v1095
      %v1194 = vpop.f32.mrf.mxu0
      %v1195 = vadd.f32 %v1131, %v1194
      %1196 = vmatmul.f32.gmra.mxu0 %v1096
      %v1197 = vpop.f32.mrf.mxu0
      %v1198 = vadd.f32 %v1131, %v1197
      %1199 = vdwg.mxu0
      %1200 = vmatpush.xpose.msra.mxu0 %v1128
      %1201 = vmatpush.xpose.msra.mxu0 %v1127
      %1202 = vmatpush.xpose.msra.mxu0 %v1126
      %1203 = vmatpush.xpose.msra.mxu0 %v1125
      %1204 = vmatpush.xpose.msra.mxu0 %v1124
      %1205 = vmatpush.xpose.msra.mxu0 %v1123
      %1206 = vmatpush.xpose.msra.mxu0 %v1122
      %1207 = vmatpush.xpose.msra.mxu0 %v1121
      %1208 = vmatpush.xpose.msra.mxu0 %v1120
      %1209 = vmatpush.xpose.msra.mxu0 %v1119
      %1210 = vmatpush.xpose.msra.mxu0 %v1118
      %1211 = vmatpush.xpose.msra.mxu0 %v1117
      %1212 = vmatpush.xpose.msra.mxu0 %v1116
      %1213 = vmatpush.xpose.msra.mxu0 %v1115
      %1214 = vmatpush.xpose.msra.mxu0 %v1114
      %1215 = vmatpush.xpose.msra.mxu0 %v1113
      %1216 = vmatmul.f32.gmra.mxu0 %v1081
      %v1217 = vpop.f32.mrf.mxu0
      %v1218 = vadd.f32 %v1132, %v1217
      %1219 = vmatmul.f32.gmra.mxu0 %v1082
      %v1220 = vpop.f32.mrf.mxu0
      %v1221 = vadd.f32 %v1132, %v1220
      %1222 = vmatmul.f32.gmra.mxu0 %v1083
      %v1223 = vpop.f32.mrf.mxu0
      %v1224 = vadd.f32 %v1132, %v1223
      %1225 = vmatmul.f32.gmra.mxu0 %v1084
      %v1226 = vpop.f32.mrf.mxu0
      %v1227 = vadd.f32 %v1132, %v1226
      %1228 = vmatmul.f32.gmra.mxu0 %v1085
      %v1229 = vpop.f32.mrf.mxu0
      %v1230 = vadd.f32 %v1132, %v1229
      %1231 = vmatmul.f32.gmra.mxu0 %v1086
      %v1232 = vpop.f32.mrf.mxu0
      %v1233 = vadd.f32 %v1132, %v1232
      %1234 = vmatmul.f32.gmra.mxu0 %v1087
      %v1235 = vpop.f32.mrf.mxu0
      %v1236 = vadd.f32 %v1132, %v1235
      %1237 = vmatmul.f32.gmra.mxu0 %v1088
      %v1238 = vpop.f32.mrf.mxu0
      %v1239 = vadd.f32 %v1132, %v1238
      %1240 = vmatmul.f32.gmra.mxu0 %v1089
      %v1241 = vpop.f32.mrf.mxu0
      %v1242 = vadd.f32 %v1132, %v1241
      %1243 = vmatmul.f32.gmra.mxu0 %v1090
      %v1244 = vpop.f32.mrf.mxu0
      %v1245 = vadd.f32 %v1132, %v1244
      %1246 = vmatmul.f32.gmra.mxu0 %v1091
      %v1247 = vpop.f32.mrf.mxu0
      %v1248 = vadd.f32 %v1132, %v1247
      %1249 = vmatmul.f32.gmra.mxu0 %v1092
      %v1250 = vpop.f32.mrf.mxu0
      %v1251 = vadd.f32 %v1132, %v1250
      %1252 = vmatmul.f32.gmra.mxu0 %v1093
      %v1253 = vpop.f32.mrf.mxu0
      %v1254 = vadd.f32 %v1132, %v1253
      %1255 = vmatmul.f32.gmra.mxu0 %v1094
      %v1256 = vpop.f32.mrf.mxu0
      %v1257 = vadd.f32 %v1132, %v1256
      %1258 = vmatmul.f32.gmra.mxu0 %v1095
      %v1259 = vpop.f32.mrf.mxu0
      %v1260 = vadd.f32 %v1132, %v1259
      %1261 = vmatmul.f32.gmra.mxu0 %v1096
      %v1262 = vpop.f32.mrf.mxu0
      %v1263 = vadd.f32 %v1132, %v1262
      %1264 = vdwg.mxu0
      %v1265 = vtanh.pop %v1153
      %v1266 = vtanh.pop %v1218
      %v1267 = vtanh.pop %v1156
      %v1268 = vtanh.pop %v1221
      %v1269 = vtanh.pop %v1159
      %v1270 = vtanh.pop %v1224
      %v1271 = vtanh.pop %v1162
      %v1272 = vtanh.pop %v1227
      %v1273 = vtanh.pop %v1165
      %v1274 = vtanh.pop %v1230
      %v1275 = vtanh.pop %v1168
      %v1276 = vtanh.pop %v1233
      %v1277 = vtanh.pop %v1171
      %v1278 = vtanh.pop %v1236
      %v1279 = vtanh.pop %v1174
      %v1280 = vtanh.pop %v1239
      %v1281 = vtanh.pop %v1177
      %v1282 = vtanh.pop %v1242
      %v1283 = vtanh.pop %v1180
      %v1284 = vtanh.pop %v1245
      %v1285 = vtanh.pop %v1183
      %v1286 = vtanh.pop %v1248
      %v1287 = vtanh.pop %v1186
      %v1288 = vtanh.pop %v1251
      %v1289 = vtanh.pop %v1189
      %v1290 = vtanh.pop %v1254
      %v1291 = vtanh.pop %v1192
      %v1292 = vtanh.pop %v1257
      %v1293 = vtanh.pop %v1195
      %v1294 = vtanh.pop %v1260
      %v1295 = vtanh.pop %v1198
      %v1296 = vtanh.pop %v1263
      %v1297 = vld [vmem:[%s612] sm:$0xff]
      %v1298 = vld [vmem:[%s612 + $0x8] sm:$0xff]
      %v1299 = vld [vmem:[%s612 + $0x10] sm:$0xff]
      %v1300 = vld [vmem:[%s612 + $0x18] sm:$0xff]
      %v1301 = vld [vmem:[%s612 + $0x20] sm:$0xff]
      %v1302 = vld [vmem:[%s612 + $0x28] sm:$0xff]
      %v1303 = vld [vmem:[%s612 + $0x30] sm:$0xff]
      %v1304 = vld [vmem:[%s612 + $0x38] sm:$0xff]
      %v1305 = vld [vmem:[%s612 + $0x40] sm:$0xff]
      %v1306 = vld [vmem:[%s612 + $0x48] sm:$0xff]
      %v1307 = vld [vmem:[%s612 + $0x50] sm:$0xff]
      %v1308 = vld [vmem:[%s612 + $0x58] sm:$0xff]
      %v1309 = vld [vmem:[%s612 + $0x60] sm:$0xff]
      %v1310 = vld [vmem:[%s612 + $0x68] sm:$0xff]
      %v1311 = vld [vmem:[%s612 + $0x70] sm:$0xff]
      %v1312 = vld [vmem:[%s612 + $0x78] sm:$0xff]
      %v1313 = vld [vmem:[%s615] sm:$0x1]
      %v1315 = vperm.slane %v1313, 0
      %1317 = vmatpush.msra.mxu0 %v1312
      %1318 = vmatpush.msra.mxu0 %v1311
      %1319 = vmatpush.msra.mxu0 %v1310
      %1320 = vmatpush.msra.mxu0 %v1309
      %1321 = vmatpush.msra.mxu0 %v1308
      %1322 = vmatpush.msra.mxu0 %v1307
      %1323 = vmatpush.msra.mxu0 %v1306
      %1324 = vmatpush.msra.mxu0 %v1305
      %1325 = vmatpush.msra.mxu0 %v1304
      %1326 = vmatpush.msra.mxu0 %v1303
      %1327 = vmatpush.msra.mxu0 %v1302
      %1328 = vmatpush.msra.mxu0 %v1301
      %1329 = vmatpush.msra.mxu0 %v1300
      %1330 = vmatpush.msra.mxu0 %v1299
      %1331 = vmatpush.msra.mxu0 %v1298
      %1332 = vmatpush.msra.mxu0 %v1297
      %1333 = vmatmul.f32.gmra.mxu0 %v1265
      %v1334 = vpop.f32.mrf.mxu0
      %v1335 = vadd.f32 %v1315, %v1334
      %1336 = vmatmul.f32.gmra.mxu0 %v1267
      %v1337 = vpop.f32.mrf.mxu0
      %v1338 = vadd.f32 %v1315, %v1337
      %1339 = vmatmul.f32.gmra.mxu0 %v1269
      %v1340 = vpop.f32.mrf.mxu0
      %v1341 = vadd.f32 %v1315, %v1340
      %1342 = vmatmul.f32.gmra.mxu0 %v1271
      %v1343 = vpop.f32.mrf.mxu0
      %v1344 = vadd.f32 %v1315, %v1343
      %1345 = vmatmul.f32.gmra.mxu0 %v1273
      %v1346 = vpop.f32.mrf.mxu0
      %v1347 = vadd.f32 %v1315, %v1346
      %1348 = vmatmul.f32.gmra.mxu0 %v1275
      %v1349 = vpop.f32.mrf.mxu0
      %v1350 = vadd.f32 %v1315, %v1349
      %1351 = vmatmul.f32.gmra.mxu0 %v1277
      %v1352 = vpop.f32.mrf.mxu0
      %v1353 = vadd.f32 %v1315, %v1352
      %1354 = vmatmul.f32.gmra.mxu0 %v1279
      %v1355 = vpop.f32.mrf.mxu0
      %v1356 = vadd.f32 %v1315, %v1355
      %1357 = vmatmul.f32.gmra.mxu0 %v1281
      %v1358 = vpop.f32.mrf.mxu0
      %v1359 = vadd.f32 %v1315, %v1358
      %1360 = vmatmul.f32.gmra.mxu0 %v1283
      %v1361 = vpop.f32.mrf.mxu0
      %v1362 = vadd.f32 %v1315, %v1361
      %1363 = vmatmul.f32.gmra.mxu0 %v1285
      %v1364 = vpop.f32.mrf.mxu0
      %v1365 = vadd.f32 %v1315, %v1364
      %1366 = vmatmul.f32.gmra.mxu0 %v1287
      %v1367 = vpop.f32.mrf.mxu0
      %v1368 = vadd.f32 %v1315, %v1367
      %1369 = vmatmul.f32.gmra.mxu0 %v1289
      %v1370 = vpop.f32.mrf.mxu0
      %v1371 = vadd.f32 %v1315, %v1370
      %1372 = vmatmul.f32.gmra.mxu0 %v1291
      %v1373 = vpop.f32.mrf.mxu0
      %v1374 = vadd.f32 %v1315, %v1373
      %1375 = vmatmul.f32.gmra.mxu0 %v1293
      %v1376 = vpop.f32.mrf.mxu0
      %v1377 = vadd.f32 %v1315, %v1376
      %1378 = vmatmul.f32.gmra.mxu0 %v1295
      %v1379 = vpop.f32.mrf.mxu0
      %v1380 = vadd.f32 %v1315, %v1379
      %1381 = vdwg.mxu0
      %v1382 = vtanh.pop %v1335
      %v1383 = vtanh.pop %v1338
      %v1384 = vtanh.pop %v1341
      %v1385 = vtanh.pop %v1344
      %v1386 = vtanh.pop %v1347
      %v1387 = vtanh.pop %v1350
      %v1388 = vtanh.pop %v1353
      %v1389 = vtanh.pop %v1356
      %v1390 = vtanh.pop %v1359
      %v1391 = vtanh.pop %v1362
      %v1392 = vtanh.pop %v1365
      %v1393 = vtanh.pop %v1368
      %v1394 = vtanh.pop %v1371
      %v1395 = vtanh.pop %v1374
      %v1396 = vtanh.pop %v1377
      %v1397 = vtanh.pop %v1380
      %1398 = vst [vmem:[%s633] sm:$0xff] %v1382
      %1399 = vst [vmem:[%s633 + $0x8] sm:$0xff] %v1383
      %1400 = vst [vmem:[%s633 + $0x10] sm:$0xff] %v1384
      %1401 = vst [vmem:[%s633 + $0x18] sm:$0xff] %v1385
      %1402 = vst [vmem:[%s633 + $0x20] sm:$0xff] %v1386
      %1403 = vst [vmem:[%s633 + $0x28] sm:$0xff] %v1387
      %1404 = vst [vmem:[%s633 + $0x30] sm:$0xff] %v1388
      %1405 = vst [vmem:[%s633 + $0x38] sm:$0xff] %v1389
      %1406 = vst [vmem:[%s633 + $0x40] sm:$0xff] %v1390
      %1407 = vst [vmem:[%s633 + $0x48] sm:$0xff] %v1391
      %1408 = vst [vmem:[%s633 + $0x50] sm:$0xff] %v1392
      %1409 = vst [vmem:[%s633 + $0x58] sm:$0xff] %v1393
      %1410 = vst [vmem:[%s633 + $0x60] sm:$0xff] %v1394
      %1411 = vst [vmem:[%s633 + $0x68] sm:$0xff] %v1395
      %1412 = vst [vmem:[%s633 + $0x70] sm:$0xff] %v1396
      %1413 = vst [vmem:[%s633 + $0x78] sm:$0xff] %v1397
      %v1414 = vld [vmem:[%s620] sm:$0xff]
      %v1415 = vld [vmem:[%s620 + $0x8] sm:$0xff]
      %v1416 = vld [vmem:[%s620 + $0x10] sm:$0xff]
      %v1417 = vld [vmem:[%s620 + $0x18] sm:$0xff]
      %v1418 = vld [vmem:[%s620 + $0x20] sm:$0xff]
      %v1419 = vld [vmem:[%s620 + $0x28] sm:$0xff]
      %v1420 = vld [vmem:[%s620 + $0x30] sm:$0xff]
      %v1421 = vld [vmem:[%s620 + $0x38] sm:$0xff]
      %v1422 = vld [vmem:[%s620 + $0x40] sm:$0xff]
      %v1423 = vld [vmem:[%s620 + $0x48] sm:$0xff]
      %v1424 = vld [vmem:[%s620 + $0x50] sm:$0xff]
      %v1425 = vld [vmem:[%s620 + $0x58] sm:$0xff]
      %v1426 = vld [vmem:[%s620 + $0x60] sm:$0xff]
      %v1427 = vld [vmem:[%s620 + $0x68] sm:$0xff]
      %v1428 = vld [vmem:[%s620 + $0x70] sm:$0xff]
      %v1429 = vld [vmem:[%s620 + $0x78] sm:$0xff]
      %v1430 = vld [vmem:[%s623] sm:$0x1]
      %v1432 = vperm.slane %v1430, 0
      %1434 = vmatpush.msra.mxu0 %v1429
      %1435 = vmatpush.msra.mxu0 %v1428
      %1436 = vmatpush.msra.mxu0 %v1427
      %1437 = vmatpush.msra.mxu0 %v1426
      %1438 = vmatpush.msra.mxu0 %v1425
      %1439 = vmatpush.msra.mxu0 %v1424
      %1440 = vmatpush.msra.mxu0 %v1423
      %1441 = vmatpush.msra.mxu0 %v1422
      %1442 = vmatpush.msra.mxu0 %v1421
      %1443 = vmatpush.msra.mxu0 %v1420
      %1444 = vmatpush.msra.mxu0 %v1419
      %1445 = vmatpush.msra.mxu0 %v1418
      %1446 = vmatpush.msra.mxu0 %v1417
      %1447 = vmatpush.msra.mxu0 %v1416
      %1448 = vmatpush.msra.mxu0 %v1415
      %1449 = vmatpush.msra.mxu0 %v1414
      %1450 = vmatmul.f32.gmra.mxu0 %v1266
      %v1451 = vpop.f32.mrf.mxu0
      %v1452 = vadd.f32 %v1432, %v1451
      %1453 = vmatmul.f32.gmra.mxu0 %v1268
      %v1454 = vpop.f32.mrf.mxu0
      %v1455 = vadd.f32 %v1432, %v1454
      %1456 = vmatmul.f32.gmra.mxu0 %v1270
      %v1457 = vpop.f32.mrf.mxu0
      %v1458 = vadd.f32 %v1432, %v1457
      %1459 = vmatmul.f32.gmra.mxu0 %v1272
      %v1460 = vpop.f32.mrf.mxu0
      %v1461 = vadd.f32 %v1432, %v1460
      %1462 = vmatmul.f32.gmra.mxu0 %v1274
      %v1463 = vpop.f32.mrf.mxu0
      %v1464 = vadd.f32 %v1432, %v1463
      %1465 = vmatmul.f32.gmra.mxu0 %v1276
      %v1466 = vpop.f32.mrf.mxu0
      %v1467 = vadd.f32 %v1432, %v1466
      %1468 = vmatmul.f32.gmra.mxu0 %v1278
      %v1469 = vpop.f32.mrf.mxu0
      %v1470 = vadd.f32 %v1432, %v1469
      %1471 = vmatmul.f32.gmra.mxu0 %v1280
      %v1472 = vpop.f32.mrf.mxu0
      %v1473 = vadd.f32 %v1432, %v1472
      %1474 = vmatmul.f32.gmra.mxu0 %v1282
      %v1475 = vpop.f32.mrf.mxu0
      %v1476 = vadd.f32 %v1432, %v1475
      %1477 = vmatmul.f32.gmra.mxu0 %v1284
      %v1478 = vpop.f32.mrf.mxu0
      %v1479 = vadd.f32 %v1432, %v1478
      %1480 = vmatmul.f32.gmra.mxu0 %v1286
      %v1481 = vpop.f32.mrf.mxu0
      %v1482 = vadd.f32 %v1432, %v1481
      %1483 = vmatmul.f32.gmra.mxu0 %v1288
      %v1484 = vpop.f32.mrf.mxu0
      %v1485 = vadd.f32 %v1432, %v1484
      %1486 = vmatmul.f32.gmra.mxu0 %v1290
      %v1487 = vpop.f32.mrf.mxu0
      %v1488 = vadd.f32 %v1432, %v1487
      %1489 = vmatmul.f32.gmra.mxu0 %v1292
      %v1490 = vpop.f32.mrf.mxu0
      %v1491 = vadd.f32 %v1432, %v1490
      %1492 = vmatmul.f32.gmra.mxu0 %v1294
      %v1493 = vpop.f32.mrf.mxu0
      %v1494 = vadd.f32 %v1432, %v1493
      %1495 = vmatmul.f32.gmra.mxu0 %v1296
      %v1496 = vpop.f32.mrf.mxu0
      %v1497 = vadd.f32 %v1432, %v1496
      %1498 = vdwg.mxu0
      %v1499 = vtanh.pop %v1452
      %v1500 = vtanh.pop %v1455
      %v1501 = vtanh.pop %v1458
      %v1502 = vtanh.pop %v1461
      %v1503 = vtanh.pop %v1464
      %v1504 = vtanh.pop %v1467
      %v1505 = vtanh.pop %v1470
      %v1506 = vtanh.pop %v1473
      %v1507 = vtanh.pop %v1476
      %v1508 = vtanh.pop %v1479
      %v1509 = vtanh.pop %v1482
      %v1510 = vtanh.pop %v1485
      %v1511 = vtanh.pop %v1488
      %v1512 = vtanh.pop %v1491
      %v1513 = vtanh.pop %v1494
      %v1514 = vtanh.pop %v1497
      %1515 = vst [vmem:[%s638] sm:$0xff] %v1499
      %1516 = vst [vmem:[%s638 + $0x8] sm:$0xff] %v1500
      %1517 = vst [vmem:[%s638 + $0x10] sm:$0xff] %v1501
      %1518 = vst [vmem:[%s638 + $0x18] sm:$0xff] %v1502
      %1519 = vst [vmem:[%s638 + $0x20] sm:$0xff] %v1503
      %1520 = vst [vmem:[%s638 + $0x28] sm:$0xff] %v1504
      %1521 = vst [vmem:[%s638 + $0x30] sm:$0xff] %v1505
      %1522 = vst [vmem:[%s638 + $0x38] sm:$0xff] %v1506
      %1523 = vst [vmem:[%s638 + $0x40] sm:$0xff] %v1507
      %1524 = vst [vmem:[%s638 + $0x48] sm:$0xff] %v1508
      %1525 = vst [vmem:[%s638 + $0x50] sm:$0xff] %v1509
      %1526 = vst [vmem:[%s638 + $0x58] sm:$0xff] %v1510
      %1527 = vst [vmem:[%s638 + $0x60] sm:$0xff] %v1511
      %1528 = vst [vmem:[%s638 + $0x68] sm:$0xff] %v1512
      %1529 = vst [vmem:[%s638 + $0x70] sm:$0xff] %v1513
      %1530 = vst [vmem:[%s638 + $0x78] sm:$0xff] %v1514
      %v1531 = vmul.f32 %v1081, %v1081
      %v1532 = vmul.f32 %v1082, %v1082
      %v1533 = vmul.f32 %v1083, %v1083
      %v1534 = vmul.f32 %v1084, %v1084
      %v1535 = vmul.f32 %v1085, %v1085
      %v1536 = vmul.f32 %v1086, %v1086
      %v1537 = vmul.f32 %v1087, %v1087
      %v1538 = vmul.f32 %v1088, %v1088
      %v1539 = vmul.f32 %v1089, %v1089
      %v1540 = vmul.f32 %v1090, %v1090
      %v1541 = vmul.f32 %v1091, %v1091
      %v1542 = vmul.f32 %v1092, %v1092
      %v1543 = vmul.f32 %v1093, %v1093
      %v1544 = vmul.f32 %v1094, %v1094
      %v1545 = vmul.f32 %v1095, %v1095
      %v1546 = vmul.f32 %v1096, %v1096
      %1547 = vadd.xlane.f32.xlu0 %v1531
      %v1548 = vpop.xlane.xlu0 %1547
      %1549 = vadd.xlane.f32.xlu0 %v1532
      %v1550 = vpop.xlane.xlu0 %1549
      %1551 = vadd.xlane.f32.xlu0 %v1533
      %v1552 = vpop.xlane.xlu0 %1551
      %1553 = vadd.xlane.f32.xlu0 %v1534
      %v1554 = vpop.xlane.xlu0 %1553
      %1555 = vadd.xlane.f32.xlu0 %v1535
      %v1556 = vpop.xlane.xlu0 %1555
      %1557 = vadd.xlane.f32.xlu0 %v1536
      %v1558 = vpop.xlane.xlu0 %1557
      %1559 = vadd.xlane.f32.xlu0 %v1537
      %v1560 = vpop.xlane.xlu0 %1559
      %1561 = vadd.xlane.f32.xlu0 %v1538
      %v1562 = vpop.xlane.xlu0 %1561
      %1563 = vadd.xlane.f32.xlu0 %v1539
      %v1564 = vpop.xlane.xlu0 %1563
      %1565 = vadd.xlane.f32.xlu0 %v1540
      %v1566 = vpop.xlane.xlu0 %1565
      %1567 = vadd.xlane.f32.xlu0 %v1541
      %v1568 = vpop.xlane.xlu0 %1567
      %1569 = vadd.xlane.f32.xlu0 %v1542
      %v1570 = vpop.xlane.xlu0 %1569
      %1571 = vadd.xlane.f32.xlu0 %v1543
      %v1572 = vpop.xlane.xlu0 %1571
      %1573 = vadd.xlane.f32.xlu0 %v1544
      %v1574 = vpop.xlane.xlu0 %1573
      %1575 = vadd.xlane.f32.xlu0 %v1545
      %v1576 = vpop.xlane.xlu0 %1575
      %1577 = vadd.xlane.f32.xlu0 %v1546
      %v1578 = vpop.xlane.xlu0 %1577
      %v1579 = vmax.f32 %v1548, 1e-16
      %v1580 = vmax.f32 %v1550, 1e-16
      %v1581 = vmax.f32 %v1552, 1e-16
      %v1582 = vmax.f32 %v1554, 1e-16
      %v1583 = vmax.f32 %v1556, 1e-16
      %v1584 = vmax.f32 %v1558, 1e-16
      %v1585 = vmax.f32 %v1560, 1e-16
      %v1586 = vmax.f32 %v1562, 1e-16
      %v1587 = vmax.f32 %v1564, 1e-16
      %v1588 = vmax.f32 %v1566, 1e-16
      %v1589 = vmax.f32 %v1568, 1e-16
      %v1590 = vmax.f32 %v1570, 1e-16
      %v1591 = vmax.f32 %v1572, 1e-16
      %v1592 = vmax.f32 %v1574, 1e-16
      %v1593 = vmax.f32 %v1576, 1e-16
      %v1594 = vmax.f32 %v1578, 1e-16
      %v1595 = vrsqrt.pop %v1579
      %v1596 = vmul.f32 %v1595, %v1579
      %v1597 = vmul.f32 %v1596, %v1595
      %v1598 = vmul.f32 0.5, %v1597
      %v1599 = vsub.f32 1.5, %v1598
      %v1600 = vmul.f32 %v1595, %v1599
      %vm1601 = vweird.f32 %v1579
      %vm1602 = vweird.f32 %v1595
      %vm1603 = vmor %vm1601, %vm1602
      %v1604 = vsel %vm1603, %v1595, %v1600
      %v1605 = vrsqrt.pop %v1580
      %v1606 = vmul.f32 %v1605, %v1580
      %v1607 = vmul.f32 %v1606, %v1605
      %v1608 = vmul.f32 0.5, %v1607
      %v1609 = vsub.f32 1.5, %v1608
      %v1610 = vmul.f32 %v1605, %v1609
      %vm1611 = vweird.f32 %v1580
      %vm1612 = vweird.f32 %v1605
      %vm1613 = vmor %vm1611, %vm1612
      %v1614 = vsel %vm1613, %v1605, %v1610
      %v1615 = vrsqrt.pop %v1581
      %v1616 = vmul.f32 %v1615, %v1581
      %v1617 = vmul.f32 %v1616, %v1615
      %v1618 = vmul.f32 0.5, %v1617
      %v1619 = vsub.f32 1.5, %v1618
      %v1620 = vmul.f32 %v1615, %v1619
      %vm1621 = vweird.f32 %v1581
      %vm1622 = vweird.f32 %v1615
      %vm1623 = vmor %vm1621, %vm1622
      %v1624 = vsel %vm1623, %v1615, %v1620
      %v1625 = vrsqrt.pop %v1582
      %v1626 = vmul.f32 %v1625, %v1582
      %v1627 = vmul.f32 %v1626, %v1625
      %v1628 = vmul.f32 0.5, %v1627
      %v1629 = vsub.f32 1.5, %v1628
      %v1630 = vmul.f32 %v1625, %v1629
      %vm1631 = vweird.f32 %v1582
      %vm1632 = vweird.f32 %v1625
      %vm1633 = vmor %vm1631, %vm1632
      %v1634 = vsel %vm1633, %v1625, %v1630
      %v1635 = vrsqrt.pop %v1583
      %v1636 = vmul.f32 %v1635, %v1583
      %v1637 = vmul.f32 %v1636, %v1635
      %v1638 = vmul.f32 0.5, %v1637
      %v1639 = vsub.f32 1.5, %v1638
      %v1640 = vmul.f32 %v1635, %v1639
      %vm1641 = vweird.f32 %v1583
      %vm1642 = vweird.f32 %v1635
      %vm1643 = vmor %vm1641, %vm1642
      %v1644 = vsel %vm1643, %v1635, %v1640
      %v1645 = vrsqrt.pop %v1584
      %v1646 = vmul.f32 %v1645, %v1584
      %v1647 = vmul.f32 %v1646, %v1645
      %v1648 = vmul.f32 0.5, %v1647
      %v1649 = vsub.f32 1.5, %v1648
      %v1650 = vmul.f32 %v1645, %v1649
      %vm1651 = vweird.f32 %v1584
      %vm1652 = vweird.f32 %v1645
      %vm1653 = vmor %vm1651, %vm1652
      %v1654 = vsel %vm1653, %v1645, %v1650
      %v1655 = vrsqrt.pop %v1585
      %v1656 = vmul.f32 %v1655, %v1585
      %v1657 = vmul.f32 %v1656, %v1655
      %v1658 = vmul.f32 0.5, %v1657
      %v1659 = vsub.f32 1.5, %v1658
      %v1660 = vmul.f32 %v1655, %v1659
      %vm1661 = vweird.f32 %v1585
      %vm1662 = vweird.f32 %v1655
      %vm1663 = vmor %vm1661, %vm1662
      %v1664 = vsel %vm1663, %v1655, %v1660
      %v1665 = vrsqrt.pop %v1586
      %v1666 = vmul.f32 %v1665, %v1586
      %v1667 = vmul.f32 %v1666, %v1665
      %v1668 = vmul.f32 0.5, %v1667
      %v1669 = vsub.f32 1.5, %v1668
      %v1670 = vmul.f32 %v1665, %v1669
      %vm1671 = vweird.f32 %v1586
      %vm1672 = vweird.f32 %v1665
      %vm1673 = vmor %vm1671, %vm1672
      %v1674 = vsel %vm1673, %v1665, %v1670
      %v1675 = vrsqrt.pop %v1587
      %v1676 = vmul.f32 %v1675, %v1587
      %v1677 = vmul.f32 %v1676, %v1675
      %v1678 = vmul.f32 0.5, %v1677
      %v1679 = vsub.f32 1.5, %v1678
      %v1680 = vmul.f32 %v1675, %v1679
      %vm1681 = vweird.f32 %v1587
      %vm1682 = vweird.f32 %v1675
      %vm1683 = vmor %vm1681, %vm1682
      %v1684 = vsel %vm1683, %v1675, %v1680
      %v1685 = vrsqrt.pop %v1588
      %v1686 = vmul.f32 %v1685, %v1588
      %v1687 = vmul.f32 %v1686, %v1685
      %v1688 = vmul.f32 0.5, %v1687
      %v1689 = vsub.f32 1.5, %v1688
      %v1690 = vmul.f32 %v1685, %v1689
      %vm1691 = vweird.f32 %v1588
      %vm1692 = vweird.f32 %v1685
      %vm1693 = vmor %vm1691, %vm1692
      %v1694 = vsel %vm1693, %v1685, %v1690
      %v1695 = vrsqrt.pop %v1589
      %v1696 = vmul.f32 %v1695, %v1589
      %v1697 = vmul.f32 %v1696, %v1695
      %v1698 = vmul.f32 0.5, %v1697
      %v1699 = vsub.f32 1.5, %v1698
      %v1700 = vmul.f32 %v1695, %v1699
      %vm1701 = vweird.f32 %v1589
      %vm1702 = vweird.f32 %v1695
      %vm1703 = vmor %vm1701, %vm1702
      %v1704 = vsel %vm1703, %v1695, %v1700
      %v1705 = vrsqrt.pop %v1590
      %v1706 = vmul.f32 %v1705, %v1590
      %v1707 = vmul.f32 %v1706, %v1705
      %v1708 = vmul.f32 0.5, %v1707
      %v1709 = vsub.f32 1.5, %v1708
      %v1710 = vmul.f32 %v1705, %v1709
      %vm1711 = vweird.f32 %v1590
      %vm1712 = vweird.f32 %v1705
      %vm1713 = vmor %vm1711, %vm1712
      %v1714 = vsel %vm1713, %v1705, %v1710
      %v1715 = vrsqrt.pop %v1591
      %v1716 = vmul.f32 %v1715, %v1591
      %v1717 = vmul.f32 %v1716, %v1715
      %v1718 = vmul.f32 0.5, %v1717
      %v1719 = vsub.f32 1.5, %v1718
      %v1720 = vmul.f32 %v1715, %v1719
      %vm1721 = vweird.f32 %v1591
      %vm1722 = vweird.f32 %v1715
      %vm1723 = vmor %vm1721, %vm1722
      %v1724 = vsel %vm1723, %v1715, %v1720
      %v1725 = vrsqrt.pop %v1592
      %v1726 = vmul.f32 %v1725, %v1592
      %v1727 = vmul.f32 %v1726, %v1725
      %v1728 = vmul.f32 0.5, %v1727
      %v1729 = vsub.f32 1.5, %v1728
      %v1730 = vmul.f32 %v1725, %v1729
      %vm1731 = vweird.f32 %v1592
      %vm1732 = vweird.f32 %v1725
      %vm1733 = vmor %vm1731, %vm1732
      %v1734 = vsel %vm1733, %v1725, %v1730
      %v1735 = vrsqrt.pop %v1593
      %v1736 = vmul.f32 %v1735, %v1593
      %v1737 = vmul.f32 %v1736, %v1735
      %v1738 = vmul.f32 0.5, %v1737
      %v1739 = vsub.f32 1.5, %v1738
      %v1740 = vmul.f32 %v1735, %v1739
      %vm1741 = vweird.f32 %v1593
      %vm1742 = vweird.f32 %v1735
      %vm1743 = vmor %vm1741, %vm1742
      %v1744 = vsel %vm1743, %v1735, %v1740
      %v1745 = vrsqrt.pop %v1594
      %v1746 = vmul.f32 %v1745, %v1594
      %v1747 = vmul.f32 %v1746, %v1745
      %v1748 = vmul.f32 0.5, %v1747
      %v1749 = vsub.f32 1.5, %v1748
      %v1750 = vmul.f32 %v1745, %v1749
      %vm1751 = vweird.f32 %v1594
      %vm1752 = vweird.f32 %v1745
      %vm1753 = vmor %vm1751, %vm1752
      %v1754 = vsel %vm1753, %v1745, %v1750
      %v1755 = vmul.f32 %v1081, %v1604
      %v1756 = vmul.f32 %v1082, %v1614
      %v1757 = vmul.f32 %v1083, %v1624
      %v1758 = vmul.f32 %v1084, %v1634
      %v1759 = vmul.f32 %v1085, %v1644
      %v1760 = vmul.f32 %v1086, %v1654
      %v1761 = vmul.f32 %v1087, %v1664
      %v1762 = vmul.f32 %v1088, %v1674
      %v1763 = vmul.f32 %v1089, %v1684
      %v1764 = vmul.f32 %v1090, %v1694
      %v1765 = vmul.f32 %v1091, %v1704
      %v1766 = vmul.f32 %v1092, %v1714
      %v1767 = vmul.f32 %v1093, %v1724
      %v1768 = vmul.f32 %v1094, %v1734
      %v1769 = vmul.f32 %v1095, %v1744
      %v1770 = vmul.f32 %v1096, %v1754
      %1771 = vmatpush.xpose.msra.mxu0 %v1770
      %1772 = vmatpush.xpose.msra.mxu0 %v1769
      %1773 = vmatpush.xpose.msra.mxu0 %v1768
      %1774 = vmatpush.xpose.msra.mxu0 %v1767
      %1775 = vmatpush.xpose.msra.mxu0 %v1766
      %1776 = vmatpush.xpose.msra.mxu0 %v1765
      %1777 = vmatpush.xpose.msra.mxu0 %v1764
      %1778 = vmatpush.xpose.msra.mxu0 %v1763
      %1779 = vmatpush.xpose.msra.mxu0 %v1762
      %1780 = vmatpush.xpose.msra.mxu0 %v1761
      %1781 = vmatpush.xpose.msra.mxu0 %v1760
      %1782 = vmatpush.xpose.msra.mxu0 %v1759
      %1783 = vmatpush.xpose.msra.mxu0 %v1758
      %1784 = vmatpush.xpose.msra.mxu0 %v1757
      %1785 = vmatpush.xpose.msra.mxu0 %v1756
      %1786 = vmatpush.xpose.msra.mxu0 %v1755
      %1787 = vmatmul.f32.gmra.mxu0 %v1755
      %v1788 = vpop.f32.mrf.mxu0
      %v1789 = vadd.f32 0.0, %v1788
      %1790 = vmatmul.f32.gmra.mxu0 %v1756
      %v1791 = vpop.f32.mrf.mxu0
      %v1792 = vadd.f32 0.0, %v1791
      %1793 = vmatmul.f32.gmra.mxu0 %v1757
      %v1794 = vpop.f32.mrf.mxu0
      %v1795 = vadd.f32 0.0, %v1794
      %1796 = vmatmul.f32.gmra.mxu0 %v1758
      %v1797 = vpop.f32.mrf.mxu0
      %v1798 = vadd.f32 0.0, %v1797
      %1799 = vmatmul.f32.gmra.mxu0 %v1759
      %v1800 = vpop.f32.mrf.mxu0
      %v1801 = vadd.f32 0.0, %v1800
      %1802 = vmatmul.f32.gmra.mxu0 %v1760
      %v1803 = vpop.f32.mrf.mxu0
      %v1804 = vadd.f32 0.0, %v1803
      %1805 = vmatmul.f32.gmra.mxu0 %v1761
      %v1806 = vpop.f32.mrf.mxu0
      %v1807 = vadd.f32 0.0, %v1806
      %1808 = vmatmul.f32.gmra.mxu0 %v1762
      %v1809 = vpop.f32.mrf.mxu0
      %v1810 = vadd.f32 0.0, %v1809
      %1811 = vmatmul.f32.gmra.mxu0 %v1763
      %v1812 = vpop.f32.mrf.mxu0
      %v1813 = vadd.f32 0.0, %v1812
      %1814 = vmatmul.f32.gmra.mxu0 %v1764
      %v1815 = vpop.f32.mrf.mxu0
      %v1816 = vadd.f32 0.0, %v1815
      %1817 = vmatmul.f32.gmra.mxu0 %v1765
      %v1818 = vpop.f32.mrf.mxu0
      %v1819 = vadd.f32 0.0, %v1818
      %1820 = vmatmul.f32.gmra.mxu0 %v1766
      %v1821 = vpop.f32.mrf.mxu0
      %v1822 = vadd.f32 0.0, %v1821
      %1823 = vmatmul.f32.gmra.mxu0 %v1767
      %v1824 = vpop.f32.mrf.mxu0
      %v1825 = vadd.f32 0.0, %v1824
      %1826 = vmatmul.f32.gmra.mxu0 %v1768
      %v1827 = vpop.f32.mrf.mxu0
      %v1828 = vadd.f32 0.0, %v1827
      %1829 = vmatmul.f32.gmra.mxu0 %v1769
      %v1830 = vpop.f32.mrf.mxu0
      %v1831 = vadd.f32 0.0, %v1830
      %1832 = vmatmul.f32.gmra.mxu0 %v1770
      %v1833 = vpop.f32.mrf.mxu0
      %v1834 = vadd.f32 0.0, %v1833
      %1835 = vdwg.mxu0
      %v1836 = vsub.f32 1.0, %v1789
      %v1837 = vsub.f32 1.0, %v1792
      %v1838 = vsub.f32 1.0, %v1795
      %v1839 = vsub.f32 1.0, %v1798
      %v1840 = vsub.f32 1.0, %v1801
      %v1841 = vsub.f32 1.0, %v1804
      %v1842 = vsub.f32 1.0, %v1807
      %v1843 = vsub.f32 1.0, %v1810
      %v1844 = vsub.f32 1.0, %v1813
      %v1845 = vsub.f32 1.0, %v1816
      %v1846 = vsub.f32 1.0, %v1819
      %v1847 = vsub.f32 1.0, %v1822
      %v1848 = vsub.f32 1.0, %v1825
      %v1849 = vsub.f32 1.0, %v1828
      %v1850 = vsub.f32 1.0, %v1831
      %v1851 = vsub.f32 1.0, %v1834
      %v1852 = vmul.f32 %v1836, %v1836
      %v1853 = vmul.f32 %v1837, %v1837
      %v1854 = vmul.f32 %v1838, %v1838
      %v1855 = vmul.f32 %v1839, %v1839
      %v1856 = vmul.f32 %v1840, %v1840
      %v1857 = vmul.f32 %v1841, %v1841
      %v1858 = vmul.f32 %v1842, %v1842
      %v1859 = vmul.f32 %v1843, %v1843
      %v1860 = vmul.f32 %v1844, %v1844
      %v1861 = vmul.f32 %v1845, %v1845
      %v1862 = vmul.f32 %v1846, %v1846
      %v1863 = vmul.f32 %v1847, %v1847
      %v1864 = vmul.f32 %v1848, %v1848
      %v1865 = vmul.f32 %v1849, %v1849
      %v1866 = vmul.f32 %v1850, %v1850
      %v1867 = vmul.f32 %v1851, %v1851
      %v1868 = vsub.f32 0.0, %v1852
      %v1869 = vsub.f32 0.0, %v1853
      %v1870 = vsub.f32 0.0, %v1854
      %v1871 = vsub.f32 0.0, %v1855
      %v1872 = vsub.f32 0.0, %v1856
      %v1873 = vsub.f32 0.0, %v1857
      %v1874 = vsub.f32 0.0, %v1858
      %v1875 = vsub.f32 0.0, %v1859
      %v1876 = vsub.f32 0.0, %v1860
      %v1877 = vsub.f32 0.0, %v1861
      %v1878 = vsub.f32 0.0, %v1862
      %v1879 = vsub.f32 0.0, %v1863
      %v1880 = vsub.f32 0.0, %v1864
      %v1881 = vsub.f32 0.0, %v1865
      %v1882 = vsub.f32 0.0, %v1866
      %v1883 = vsub.f32 0.0, %v1867
      %v1884 = vmul.f32 %v1868, 1.442695
      %v1885 = vpow.pop %v1884
      %v1886 = vmul.f32 %v1869, 1.442695
      %v1887 = vpow.pop %v1886
      %v1888 = vmul.f32 %v1870, 1.442695
      %v1889 = vpow.pop %v1888
      %v1890 = vmul.f32 %v1871, 1.442695
      %v1891 = vpow.pop %v1890
      %v1892 = vmul.f32 %v1872, 1.442695
      %v1893 = vpow.pop %v1892
      %v1894 = vmul.f32 %v1873, 1.442695
      %v1895 = vpow.pop %v1894
      %v1896 = vmul.f32 %v1874, 1.442695
      %v1897 = vpow.pop %v1896
      %v1898 = vmul.f32 %v1875, 1.442695
      %v1899 = vpow.pop %v1898
      %v1900 = vmul.f32 %v1876, 1.442695
      %v1901 = vpow.pop %v1900
      %v1902 = vmul.f32 %v1877, 1.442695
      %v1903 = vpow.pop %v1902
      %v1904 = vmul.f32 %v1878, 1.442695
      %v1905 = vpow.pop %v1904
      %v1906 = vmul.f32 %v1879, 1.442695
      %v1907 = vpow.pop %v1906
      %v1908 = vmul.f32 %v1880, 1.442695
      %v1909 = vpow.pop %v1908
      %v1910 = vmul.f32 %v1881, 1.442695
      %v1911 = vpow.pop %v1910
      %v1912 = vmul.f32 %v1882, 1.442695
      %v1913 = vpow.pop %v1912
      %v1914 = vmul.f32 %v1883, 1.442695
      %v1915 = vpow.pop %v1914
      %v1916 = vlaneseq
      %v1917 = vshrl.u32 %v1916, 7
      %v1918 = vadd.s32 %v1917, 8
      %v1919 = vadd.s32 %v1917, 16
      %v1920 = vadd.s32 %v1917, 24
      %v1921 = vadd.s32 %v1917, 32
      %v1922 = vadd.s32 %v1917, 40
      %v1923 = vadd.s32 %v1917, 48
      %v1924 = vadd.s32 %v1917, 56
      %v1925 = vadd.s32 %v1917, 64
      %v1926 = vadd.s32 %v1917, 72
      %v1927 = vadd.s32 %v1917, 80
      %v1928 = vadd.s32 %v1917, 88
      %v1929 = vadd.s32 %v1917, 96
      %v1930 = vadd.s32 %v1917, 104
      %v1931 = vadd.s32 %v1917, 112
      %v1932 = vadd.s32 %v1917, 120
      %v1933 = vlaneseq
      %v1934 = vand.u32 %v1933, 127
      %vm1935 = vcmp.lt.s32.totalorder %v1934, 8
      %vm1936 = vcmp.ne.s32.totalorder %v1917, %v1934
      %vm1937 = vcmp.ne.s32.totalorder %v1918, %v1934
      %vm1938 = vcmp.ne.s32.totalorder %v1919, %v1934
      %vm1939 = vcmp.ne.s32.totalorder %v1920, %v1934
      %vm1940 = vcmp.ne.s32.totalorder %v1921, %v1934
      %vm1941 = vcmp.ne.s32.totalorder %v1922, %v1934
      %vm1942 = vcmp.ne.s32.totalorder %v1923, %v1934
      %vm1943 = vcmp.ne.s32.totalorder %v1924, %v1934
      %vm1944 = vcmp.ne.s32.totalorder %v1925, %v1934
      %vm1945 = vcmp.ne.s32.totalorder %v1926, %v1934
      %vm1946 = vcmp.ne.s32.totalorder %v1927, %v1934
      %vm1947 = vcmp.ne.s32.totalorder %v1928, %v1934
      %vm1948 = vcmp.ne.s32.totalorder %v1929, %v1934
      %vm1949 = vcmp.ne.s32.totalorder %v1930, %v1934
      %vm1950 = vcmp.ne.s32.totalorder %v1931, %v1934
      %vm1951 = vcmp.ne.s32.totalorder %v1932, %v1934
      %vm1952 = vmand %vm1935, %vm1936
      %vm1953 = vmand %vm1935, %vm1937
      %vm1954 = vmand %vm1935, %vm1938
      %vm1955 = vmand %vm1935, %vm1939
      %vm1956 = vmand %vm1935, %vm1940
      %vm1957 = vmand %vm1935, %vm1941
      %vm1958 = vmand %vm1935, %vm1942
      %vm1959 = vmand %vm1935, %vm1943
      %vm1960 = vmand %vm1935, %vm1944
      %vm1961 = vmand %vm1935, %vm1945
      %vm1962 = vmand %vm1935, %vm1946
      %vm1963 = vmand %vm1935, %vm1947
      %vm1964 = vmand %vm1935, %vm1948
      %vm1965 = vmand %vm1935, %vm1949
      %vm1966 = vmand %vm1935, %vm1950
      %vm1967 = vmand %vm1935, %vm1951
      %v1968 = vsel %vm1952, %v1885, 0.0
      %v1969 = vsel %vm1953, %v1887, 0.0
      %v1970 = vsel %vm1954, %v1889, 0.0
      %v1971 = vsel %vm1955, %v1891, 0.0
      %v1972 = vsel %vm1956, %v1893, 0.0
      %v1973 = vsel %vm1957, %v1895, 0.0
      %v1974 = vsel %vm1958, %v1897, 0.0
      %v1975 = vsel %vm1959, %v1899, 0.0
      %v1976 = vsel %vm1960, %v1901, 0.0
      %v1977 = vsel %vm1961, %v1903, 0.0
      %v1978 = vsel %vm1962, %v1905, 0.0
      %v1979 = vsel %vm1963, %v1907, 0.0
      %v1980 = vsel %vm1964, %v1909, 0.0
      %v1981 = vsel %vm1965, %v1911, 0.0
      %v1982 = vsel %vm1966, %v1913, 0.0
      %v1983 = vsel %vm1967, %v1915, 0.0
      %1984 = vadd.xlane.f32.xlu0 %v1968
      %v1985 = vpop.xlane.xlu0 %1984
      %1986 = vadd.xlane.f32.xlu0 %v1969
      %v1987 = vpop.xlane.xlu0 %1986
      %1988 = vadd.xlane.f32.xlu0 %v1970
      %v1989 = vpop.xlane.xlu0 %1988
      %1990 = vadd.xlane.f32.xlu0 %v1971
      %v1991 = vpop.xlane.xlu0 %1990
      %1992 = vadd.xlane.f32.xlu0 %v1972
      %v1993 = vpop.xlane.xlu0 %1992
      %1994 = vadd.xlane.f32.xlu0 %v1973
      %v1995 = vpop.xlane.xlu0 %1994
      %1996 = vadd.xlane.f32.xlu0 %v1974
      %v1997 = vpop.xlane.xlu0 %1996
      %1998 = vadd.xlane.f32.xlu0 %v1975
      %v1999 = vpop.xlane.xlu0 %1998
      %2000 = vadd.xlane.f32.xlu0 %v1976
      %v2001 = vpop.xlane.xlu0 %2000
      %2002 = vadd.xlane.f32.xlu0 %v1977
      %v2003 = vpop.xlane.xlu0 %2002
      %2004 = vadd.xlane.f32.xlu0 %v1978
      %v2005 = vpop.xlane.xlu0 %2004
      %2006 = vadd.xlane.f32.xlu0 %v1979
      %v2007 = vpop.xlane.xlu0 %2006
      %2008 = vadd.xlane.f32.xlu0 %v1980
      %v2009 = vpop.xlane.xlu0 %2008
      %2010 = vadd.xlane.f32.xlu0 %v1981
      %v2011 = vpop.xlane.xlu0 %2010
      %2012 = vadd.xlane.f32.xlu0 %v1982
      %v2013 = vpop.xlane.xlu0 %2012
      %2014 = vadd.xlane.f32.xlu0 %v1983
      %v2015 = vpop.xlane.xlu0 %2014
      %v2016 = vrcp.pop %v1985
      %v2017 = vmul.f32 %v1985, %v2016
      %v2018 = vsub.f32 1.0, %v2017
      %v2019 = vmul.f32 %v2016, %v2018
      %v2020 = vadd.f32 %v2016, %v2019
      %vm2021 = vweird.f32 %v1985
      %vm2022 = vweird.f32 %v2016
      %vm2023 = vmor %vm2021, %vm2022
      %v2024 = vsel %vm2023, %v2016, %v2020
      %v2025 = vand.u32 2147483647, %v1985
      %vm2026 = vcmp.eq.f32.partialorder %v2025, 8.507059e+37
      %v2027 = vand.u32 %v1985, 2147483648
      %v2028 = vor.u32 1.1754944e-38, %v2027
      %v2029 = vsel %vm2026, %v2028, %v2024
      %v2030 = vrcp.pop %v1987
      %v2031 = vmul.f32 %v1987, %v2030
      %v2032 = vsub.f32 1.0, %v2031
      %v2033 = vmul.f32 %v2030, %v2032
      %v2034 = vadd.f32 %v2030, %v2033
      %vm2035 = vweird.f32 %v1987
      %vm2036 = vweird.f32 %v2030
      %vm2037 = vmor %vm2035, %vm2036
      %v2038 = vsel %vm2037, %v2030, %v2034
      %v2039 = vand.u32 2147483647, %v1987
      %vm2040 = vcmp.eq.f32.partialorder %v2039, 8.507059e+37
      %v2041 = vand.u32 %v1987, 2147483648
      %v2042 = vor.u32 1.1754944e-38, %v2041
      %v2043 = vsel %vm2040, %v2042, %v2038
      %v2044 = vrcp.pop %v1989
      %v2045 = vmul.f32 %v1989, %v2044
      %v2046 = vsub.f32 1.0, %v2045
      %v2047 = vmul.f32 %v2044, %v2046
      %v2048 = vadd.f32 %v2044, %v2047
      %vm2049 = vweird.f32 %v1989
      %vm2050 = vweird.f32 %v2044
      %vm2051 = vmor %vm2049, %vm2050
      %v2052 = vsel %vm2051, %v2044, %v2048
      %v2053 = vand.u32 2147483647, %v1989
      %vm2054 = vcmp.eq.f32.partialorder %v2053, 8.507059e+37
      %v2055 = vand.u32 %v1989, 2147483648
      %v2056 = vor.u32 1.1754944e-38, %v2055
      %v2057 = vsel %vm2054, %v2056, %v2052
      %v2058 = vrcp.pop %v1991
      %v2059 = vmul.f32 %v1991, %v2058
      %v2060 = vsub.f32 1.0, %v2059
      %v2061 = vmul.f32 %v2058, %v2060
      %v2062 = vadd.f32 %v2058, %v2061
      %vm2063 = vweird.f32 %v1991
      %vm2064 = vweird.f32 %v2058
      %vm2065 = vmor %vm2063, %vm2064
      %v2066 = vsel %vm2065, %v2058, %v2062
      %v2067 = vand.u32 2147483647, %v1991
      %vm2068 = vcmp.eq.f32.partialorder %v2067, 8.507059e+37
      %v2069 = vand.u32 %v1991, 2147483648
      %v2070 = vor.u32 1.1754944e-38, %v2069
      %v2071 = vsel %vm2068, %v2070, %v2066
      %v2072 = vrcp.pop %v1993
      %v2073 = vmul.f32 %v1993, %v2072
      %v2074 = vsub.f32 1.0, %v2073
      %v2075 = vmul.f32 %v2072, %v2074
      %v2076 = vadd.f32 %v2072, %v2075
      %vm2077 = vweird.f32 %v1993
      %vm2078 = vweird.f32 %v2072
      %vm2079 = vmor %vm2077, %vm2078
      %v2080 = vsel %vm2079, %v2072, %v2076
      %v2081 = vand.u32 2147483647, %v1993
      %vm2082 = vcmp.eq.f32.partialorder %v2081, 8.507059e+37
      %v2083 = vand.u32 %v1993, 2147483648
      %v2084 = vor.u32 1.1754944e-38, %v2083
      %v2085 = vsel %vm2082, %v2084, %v2080
      %v2086 = vrcp.pop %v1995
      %v2087 = vmul.f32 %v1995, %v2086
      %v2088 = vsub.f32 1.0, %v2087
      %v2089 = vmul.f32 %v2086, %v2088
      %v2090 = vadd.f32 %v2086, %v2089
      %vm2091 = vweird.f32 %v1995
      %vm2092 = vweird.f32 %v2086
      %vm2093 = vmor %vm2091, %vm2092
      %v2094 = vsel %vm2093, %v2086, %v2090
      %v2095 = vand.u32 2147483647, %v1995
      %vm2096 = vcmp.eq.f32.partialorder %v2095, 8.507059e+37
      %v2097 = vand.u32 %v1995, 2147483648
      %v2098 = vor.u32 1.1754944e-38, %v2097
      %v2099 = vsel %vm2096, %v2098, %v2094
      %v2100 = vrcp.pop %v1997
      %v2101 = vmul.f32 %v1997, %v2100
      %v2102 = vsub.f32 1.0, %v2101
      %v2103 = vmul.f32 %v2100, %v2102
      %v2104 = vadd.f32 %v2100, %v2103
      %vm2105 = vweird.f32 %v1997
      %vm2106 = vweird.f32 %v2100
      %vm2107 = vmor %vm2105, %vm2106
      %v2108 = vsel %vm2107, %v2100, %v2104
      %v2109 = vand.u32 2147483647, %v1997
      %vm2110 = vcmp.eq.f32.partialorder %v2109, 8.507059e+37
      %v2111 = vand.u32 %v1997, 2147483648
      %v2112 = vor.u32 1.1754944e-38, %v2111
      %v2113 = vsel %vm2110, %v2112, %v2108
      %v2114 = vrcp.pop %v1999
      %v2115 = vmul.f32 %v1999, %v2114
      %v2116 = vsub.f32 1.0, %v2115
      %v2117 = vmul.f32 %v2114, %v2116
      %v2118 = vadd.f32 %v2114, %v2117
      %vm2119 = vweird.f32 %v1999
      %vm2120 = vweird.f32 %v2114
      %vm2121 = vmor %vm2119, %vm2120
      %v2122 = vsel %vm2121, %v2114, %v2118
      %v2123 = vand.u32 2147483647, %v1999
      %vm2124 = vcmp.eq.f32.partialorder %v2123, 8.507059e+37
      %v2125 = vand.u32 %v1999, 2147483648
      %v2126 = vor.u32 1.1754944e-38, %v2125
      %v2127 = vsel %vm2124, %v2126, %v2122
      %v2128 = vrcp.pop %v2001
      %v2129 = vmul.f32 %v2001, %v2128
      %v2130 = vsub.f32 1.0, %v2129
      %v2131 = vmul.f32 %v2128, %v2130
      %v2132 = vadd.f32 %v2128, %v2131
      %vm2133 = vweird.f32 %v2001
      %vm2134 = vweird.f32 %v2128
      %vm2135 = vmor %vm2133, %vm2134
      %v2136 = vsel %vm2135, %v2128, %v2132
      %v2137 = vand.u32 2147483647, %v2001
      %vm2138 = vcmp.eq.f32.partialorder %v2137, 8.507059e+37
      %v2139 = vand.u32 %v2001, 2147483648
      %v2140 = vor.u32 1.1754944e-38, %v2139
      %v2141 = vsel %vm2138, %v2140, %v2136
      %v2142 = vrcp.pop %v2003
      %v2143 = vmul.f32 %v2003, %v2142
      %v2144 = vsub.f32 1.0, %v2143
      %v2145 = vmul.f32 %v2142, %v2144
      %v2146 = vadd.f32 %v2142, %v2145
      %vm2147 = vweird.f32 %v2003
      %vm2148 = vweird.f32 %v2142
      %vm2149 = vmor %vm2147, %vm2148
      %v2150 = vsel %vm2149, %v2142, %v2146
      %v2151 = vand.u32 2147483647, %v2003
      %vm2152 = vcmp.eq.f32.partialorder %v2151, 8.507059e+37
      %v2153 = vand.u32 %v2003, 2147483648
      %v2154 = vor.u32 1.1754944e-38, %v2153
      %v2155 = vsel %vm2152, %v2154, %v2150
      %v2156 = vrcp.pop %v2005
      %v2157 = vmul.f32 %v2005, %v2156
      %v2158 = vsub.f32 1.0, %v2157
      %v2159 = vmul.f32 %v2156, %v2158
      %v2160 = vadd.f32 %v2156, %v2159
      %vm2161 = vweird.f32 %v2005
      %vm2162 = vweird.f32 %v2156
      %vm2163 = vmor %vm2161, %vm2162
      %v2164 = vsel %vm2163, %v2156, %v2160
      %v2165 = vand.u32 2147483647, %v2005
      %vm2166 = vcmp.eq.f32.partialorder %v2165, 8.507059e+37
      %v2167 = vand.u32 %v2005, 2147483648
      %v2168 = vor.u32 1.1754944e-38, %v2167
      %v2169 = vsel %vm2166, %v2168, %v2164
      %v2170 = vrcp.pop %v2007
      %v2171 = vmul.f32 %v2007, %v2170
      %v2172 = vsub.f32 1.0, %v2171
      %v2173 = vmul.f32 %v2170, %v2172
      %v2174 = vadd.f32 %v2170, %v2173
      %vm2175 = vweird.f32 %v2007
      %vm2176 = vweird.f32 %v2170
      %vm2177 = vmor %vm2175, %vm2176
      %v2178 = vsel %vm2177, %v2170, %v2174
      %v2179 = vand.u32 2147483647, %v2007
      %vm2180 = vcmp.eq.f32.partialorder %v2179, 8.507059e+37
      %v2181 = vand.u32 %v2007, 2147483648
      %v2182 = vor.u32 1.1754944e-38, %v2181
      %v2183 = vsel %vm2180, %v2182, %v2178
      %v2184 = vrcp.pop %v2009
      %v2185 = vmul.f32 %v2009, %v2184
      %v2186 = vsub.f32 1.0, %v2185
      %v2187 = vmul.f32 %v2184, %v2186
      %v2188 = vadd.f32 %v2184, %v2187
      %vm2189 = vweird.f32 %v2009
      %vm2190 = vweird.f32 %v2184
      %vm2191 = vmor %vm2189, %vm2190
      %v2192 = vsel %vm2191, %v2184, %v2188
      %v2193 = vand.u32 2147483647, %v2009
      %vm2194 = vcmp.eq.f32.partialorder %v2193, 8.507059e+37
      %v2195 = vand.u32 %v2009, 2147483648
      %v2196 = vor.u32 1.1754944e-38, %v2195
      %v2197 = vsel %vm2194, %v2196, %v2192
      %v2198 = vrcp.pop %v2011
      %v2199 = vmul.f32 %v2011, %v2198
      %v2200 = vsub.f32 1.0, %v2199
      %v2201 = vmul.f32 %v2198, %v2200
      %v2202 = vadd.f32 %v2198, %v2201
      %vm2203 = vweird.f32 %v2011
      %vm2204 = vweird.f32 %v2198
      %vm2205 = vmor %vm2203, %vm2204
      %v2206 = vsel %vm2205, %v2198, %v2202
      %v2207 = vand.u32 2147483647, %v2011
      %vm2208 = vcmp.eq.f32.partialorder %v2207, 8.507059e+37
      %v2209 = vand.u32 %v2011, 2147483648
      %v2210 = vor.u32 1.1754944e-38, %v2209
      %v2211 = vsel %vm2208, %v2210, %v2206
      %v2212 = vrcp.pop %v2013
      %v2213 = vmul.f32 %v2013, %v2212
      %v2214 = vsub.f32 1.0, %v2213
      %v2215 = vmul.f32 %v2212, %v2214
      %v2216 = vadd.f32 %v2212, %v2215
      %vm2217 = vweird.f32 %v2013
      %vm2218 = vweird.f32 %v2212
      %vm2219 = vmor %vm2217, %vm2218
      %v2220 = vsel %vm2219, %v2212, %v2216
      %v2221 = vand.u32 2147483647, %v2013
      %vm2222 = vcmp.eq.f32.partialorder %v2221, 8.507059e+37
      %v2223 = vand.u32 %v2013, 2147483648
      %v2224 = vor.u32 1.1754944e-38, %v2223
      %v2225 = vsel %vm2222, %v2224, %v2220
      %v2226 = vrcp.pop %v2015
      %v2227 = vmul.f32 %v2015, %v2226
      %v2228 = vsub.f32 1.0, %v2227
      %v2229 = vmul.f32 %v2226, %v2228
      %v2230 = vadd.f32 %v2226, %v2229
      %vm2231 = vweird.f32 %v2015
      %vm2232 = vweird.f32 %v2226
      %vm2233 = vmor %vm2231, %vm2232
      %v2234 = vsel %vm2233, %v2226, %v2230
      %v2235 = vand.u32 2147483647, %v2015
      %vm2236 = vcmp.eq.f32.partialorder %v2235, 8.507059e+37
      %v2237 = vand.u32 %v2015, 2147483648
      %v2238 = vor.u32 1.1754944e-38, %v2237
      %v2239 = vsel %vm2236, %v2238, %v2234
      %v2240 = vmul.f32 %v1968, %v2029
      %v2241 = vmul.f32 %v1969, %v2043
      %v2242 = vmul.f32 %v1970, %v2057
      %v2243 = vmul.f32 %v1971, %v2071
      %v2244 = vmul.f32 %v1972, %v2085
      %v2245 = vmul.f32 %v1973, %v2099
      %v2246 = vmul.f32 %v1974, %v2113
      %v2247 = vmul.f32 %v1975, %v2127
      %v2248 = vmul.f32 %v1976, %v2141
      %v2249 = vmul.f32 %v1977, %v2155
      %v2250 = vmul.f32 %v1978, %v2169
      %v2251 = vmul.f32 %v1979, %v2183
      %v2252 = vmul.f32 %v1980, %v2197
      %v2253 = vmul.f32 %v1981, %v2211
      %v2254 = vmul.f32 %v1982, %v2225
      %v2255 = vmul.f32 %v1983, %v2239
      %v2256 = vmax.f32 %v2240, 1e-08
      %v2257 = vmax.f32 %v2241, 1e-08
      %v2258 = vmax.f32 %v2242, 1e-08
      %v2259 = vmax.f32 %v2243, 1e-08
      %v2260 = vmax.f32 %v2244, 1e-08
      %v2261 = vmax.f32 %v2245, 1e-08
      %v2262 = vmax.f32 %v2246, 1e-08
      %v2263 = vmax.f32 %v2247, 1e-08
      %v2264 = vmax.f32 %v2248, 1e-08
      %v2265 = vmax.f32 %v2249, 1e-08
      %v2266 = vmax.f32 %v2250, 1e-08
      %v2267 = vmax.f32 %v2251, 1e-08
      %v2268 = vmax.f32 %v2252, 1e-08
      %v2269 = vmax.f32 %v2253, 1e-08
      %v2270 = vmax.f32 %v2254, 1e-08
      %v2271 = vmax.f32 %v2255, 1e-08
      %v2272 = vlog2.pop %v2256
      %v2273 = vmul.f32 %v2272, 0.6931472
      %v2274 = vlog2.pop %v2257
      %v2275 = vmul.f32 %v2274, 0.6931472
      %v2276 = vlog2.pop %v2258
      %v2277 = vmul.f32 %v2276, 0.6931472
      %v2278 = vlog2.pop %v2259
      %v2279 = vmul.f32 %v2278, 0.6931472
      %v2280 = vlog2.pop %v2260
      %v2281 = vmul.f32 %v2280, 0.6931472
      %v2282 = vlog2.pop %v2261
      %v2283 = vmul.f32 %v2282, 0.6931472
      %v2284 = vlog2.pop %v2262
      %v2285 = vmul.f32 %v2284, 0.6931472
      %v2286 = vlog2.pop %v2263
      %v2287 = vmul.f32 %v2286, 0.6931472
      %v2288 = vlog2.pop %v2264
      %v2289 = vmul.f32 %v2288, 0.6931472
      %v2290 = vlog2.pop %v2265
      %v2291 = vmul.f32 %v2290, 0.6931472
      %v2292 = vlog2.pop %v2266
      %v2293 = vmul.f32 %v2292, 0.6931472
      %v2294 = vlog2.pop %v2267
      %v2295 = vmul.f32 %v2294, 0.6931472
      %v2296 = vlog2.pop %v2268
      %v2297 = vmul.f32 %v2296, 0.6931472
      %v2298 = vlog2.pop %v2269
      %v2299 = vmul.f32 %v2298, 0.6931472
      %v2300 = vlog2.pop %v2270
      %v2301 = vmul.f32 %v2300, 0.6931472
      %v2302 = vlog2.pop %v2271
      %v2303 = vmul.f32 %v2302, 0.6931472
      %2304 = vst [vmem:[%s628] sm:$0xff] %v2273
      %2305 = vst [vmem:[%s628 + $0x8] sm:$0xff] %v2275
      %2306 = vst [vmem:[%s628 + $0x10] sm:$0xff] %v2277
      %2307 = vst [vmem:[%s628 + $0x18] sm:$0xff] %v2279
      %2308 = vst [vmem:[%s628 + $0x20] sm:$0xff] %v2281
      %2309 = vst [vmem:[%s628 + $0x28] sm:$0xff] %v2283
      %2310 = vst [vmem:[%s628 + $0x30] sm:$0xff] %v2285
      %2311 = vst [vmem:[%s628 + $0x38] sm:$0xff] %v2287
      %2312 = vst [vmem:[%s628 + $0x40] sm:$0xff] %v2289
      %2313 = vst [vmem:[%s628 + $0x48] sm:$0xff] %v2291
      %2314 = vst [vmem:[%s628 + $0x50] sm:$0xff] %v2293
      %2315 = vst [vmem:[%s628 + $0x58] sm:$0xff] %v2295
      %2316 = vst [vmem:[%s628 + $0x60] sm:$0xff] %v2297
      %2317 = vst [vmem:[%s628 + $0x68] sm:$0xff] %v2299
      %2318 = vst [vmem:[%s628 + $0x70] sm:$0xff] %v2301
      %2319 = vst [vmem:[%s628 + $0x78] sm:$0xff] %v2303
      %p2320 = scmp.lt.s32.totalorder %s25, 1
      %s2321 = scalar_select %p2320, %s25, 1
      %s2322 = smul.addr %s2321, 16
      %s2323 = smul.addr %s2322, 8
      %s2324 = scalar_lea.vmem %s11, %s2323
      %p2325 = scmp.lt.s32.totalorder %s25, 1
      %s2326 = scalar_select %p2325, %s25, 1
      %s2327 = smul.addr %s2326, 16
      %s2328 = smul.addr %s2327, 8
      %s2329 = scalar_lea.vmem %s12, %s2328
      %p2330 = scmp.lt.s32.totalorder %s25, 1
      %s2331 = scalar_select %p2330, %s25, 1
      %s2332 = smul.addr %s2331, 16
      %s2333 = smul.addr %s2332, 8
      %s2334 = scalar_lea.vmem %s13, %s2333
      // Predicated region
      $region65: #{net_forward.1} parent=63 // pred_check
        %p2335 = pneg %p329
      $region66: #{net_forward.1} parent=63 // pred_check_branch
        %2337 = sbr.rel (%p2335) target = $region68
      $region67: #{net_forward.1} parent=63 // pred_region
        _
      $region68: #{net_forward.1} parent=63 // pred_fallthru
        _
      // Predicated region
      $region69: #{net_forward.1} parent=63 // pred_check
        %p2338 = pneg %p355
      $region70: #{net_forward.1} parent=63 // pred_check_branch
        %2340 = sbr.rel (%p2338) target = $region72
      $region71: #{net_forward.1} parent=63 // pred_region
        _
      $region72: #{net_forward.1} parent=63 // pred_fallthru
        _
      // Predicated region
      $region73: #{net_forward.1} parent=63 // pred_check
        %p2341 = pneg %p381
      $region74: #{net_forward.1} parent=63 // pred_check_branch
        %2343 = sbr.rel (%p2341) target = $region76
      $region75: #{net_forward.1} parent=63 // pred_region
        _
      $region76: #{net_forward.1} parent=63 // pred_fallthru
        _
    $region64: #{net_forward.1} parent=5 // pred_fallthru
      _
    %p2344 = scmp.le.s32.totalorder 2, %s20
    // Predicated region
    $region77: #{net_forward.1} parent=5 // pred_check
      %p2345 = pneg %p2344
    $region78: #{net_forward.1} parent=5 // pred_check_branch
      %2347 = sbr.rel (%p2345) target = $region80
    $region79: #{net_forward.1} parent=5 // pred_region
      %s2348 = ssub.s32 %s20, 2
      // Predicated region
      $region81: #{net_forward.1} parent=79 // pred_check
        %p2349 = pneg %p335
      $region82: #{net_forward.1} parent=79 // pred_check_branch
        %2351 = sbr.rel (%p2349) target = $region84
      $region83: #{net_forward.1} parent=79 // pred_region
        %p2352 = scmp.lt.s32.totalorder %s26, 1
        %s2353 = scalar_select %p2352, %s26, 1
        %s2354 = smul.addr %s2353, 16
        %s2355 = smul.addr %s2354, 8
        %s2356 = scalar_lea.vmem %s11, %s2355
      $region84: #{net_forward.1} parent=79 // pred_fallthru
        _
      // Predicated region
      $region85: #{net_forward.1} parent=79 // pred_check
        %p2357 = pneg %p361
      $region86: #{net_forward.1} parent=79 // pred_check_branch
        %2359 = sbr.rel (%p2357) target = $region88
      $region87: #{net_forward.1} parent=79 // pred_region
        %p2360 = scmp.lt.s32.totalorder %s26, 1
        %s2361 = scalar_select %p2360, %s26, 1
        %s2362 = smul.addr %s2361, 16
        %s2363 = smul.addr %s2362, 8
        %s2364 = scalar_lea.vmem %s12, %s2363
      $region88: #{net_forward.1} parent=79 // pred_fallthru
        _
      // Predicated region
      $region89: #{net_forward.1} parent=79 // pred_check
        %p2365 = pneg %p387
      $region90: #{net_forward.1} parent=79 // pred_check_branch
        %2367 = sbr.rel (%p2365) target = $region92
      $region91: #{net_forward.1} parent=79 // pred_region
        %p2368 = scmp.lt.s32.totalorder %s26, 1
        %s2369 = scalar_select %p2368, %s26, 1
        %s2370 = smul.addr %s2369, 16
        %s2371 = smul.addr %s2370, 8
        %s2372 = scalar_lea.vmem %s13, %s2371
      $region92: #{net_forward.1} parent=79 // pred_fallthru
        _
    $region80: #{net_forward.1} parent=5 // pred_fallthru
      _
  $region6: #{net_forward.1} parent=0 // loop_footer
    %s24 = sadd.s32 1, %s20
  $region7: #{net_forward.1} parent=0 // loop_footer_branch
    %19 = sbr.rel target = $region3
  $region8: #{net_forward.1} parent=0 // loop_exit
    _

</llo_original>
